<compile_context>
chip_gen: v7x
topology: tpu7x:2x2x1
jax: 0.10.0
libtpu: 0.0.40
codegen_flags: <defaults>
</compile_context>

<pallas_src>
import functools
import math

import jax
import jax.numpy as jnp
from jax import lax
from jax.experimental import pallas as pl
from jax.experimental.pallas import tpu as pltpu  # noqa: F401  (TPU backend)

CFG = dict(hidden=32, heads=2, layers=2, mlp=64, vocab=64,
           max_text_len=8, image_size=16, patch=8, channels=3)

LAYER_KEYS = ("ln1_g", "ln1_b", "wqkv", "bqkv", "wo", "bo",
              "ln2_g", "ln2_b", "w1", "b1", "w2", "b2")


# --------------------------- in-kernel helpers ------------------------------

def _layernorm(x, g, b):
    mu = jnp.mean(x, axis=-1, keepdims=True)
    var = jnp.mean(jnp.square(x - mu), axis=-1, keepdims=True)
    return (x - mu) * lax.rsqrt(var + 1e-5) * g + b


def _row_ids(R, S):
    # Batch / position indices for every (row, col) pair of the flattened
    # [B*S] sequence axis.  S is a power of two here -> cheap VPU bit ops.
    ri = lax.broadcasted_iota(jnp.int32, (R, R), 0)
    ci = lax.broadcasted_iota(jnp.int32, (R, R), 1)
    if S & (S - 1) == 0:
        sh = S.bit_length() - 1
        return ri >> sh, ci >> sh, ri & (S - 1), ci & (S - 1)
    return ri // S, ci // S, ri % S, ci % S


def _attention(qkv, mask, *, D, H, Dh, scale):
    # qkv: [B*S, 3*D] VMEM-resident value.  One scores matmul and one P@V
    # matmul per head over ALL B*S rows; batches are kept apart by the
    # block-diagonal additive mask, so there is no per-batch unroll and no
    # row-concatenation of per-batch results.
    heads = []
    for h in range(H):
        q = qkv[:, h * Dh:(h + 1) * Dh] * scale              # fold scale into q
        k = qkv[:, D + h * Dh:D + (h + 1) * Dh]
        v = qkv[:, 2 * D + h * Dh:2 * D + (h + 1) * Dh]
        # contract the feature dim directly -> no transposed copy of k
        s = lax.dot_general(q, k, (((1,), (1,)), ((), ())),
                            preferred_element_type=jnp.float32) + mask
        # scores are bounded (0.02-scale weights) and masked entries are -1e9,
        # so exp underflows to exactly 0 without a max-subtraction pass.
        p = jnp.exp(s)
        p = p * pl.reciprocal(jnp.sum(p, axis=-1, keepdims=True), approx=False)
        heads.append(jnp.dot(p, v, preferred_element_type=jnp.float32))
    return jnp.concatenate(heads, axis=-1)


def _transformer_layers(x, layer_refs, mask, *, H, L):
    (ln1_g, ln1_b, wqkv, bqkv, wo, bo, ln2_g, ln2_b, w1, b1, w2, b2) = layer_refs
    D = x.shape[-1]
    Dh = D // H
    scale = 1.0 / math.sqrt(Dh)
    # TODO(synk): beyond this toy config, stream layers with a grid=(L,)
    # "arbitrary" axis + per-layer BlockSpecs (lambda l: (l, ...)) and cast
    # matmul operands to bf16 — at D=32 / L=2 the resident f32 stack is fine.
    for l in range(L):                                       # static unroll (L=2)
        # ---- attention block (pre-LN, fused QKV matmul) ----
        h = _layernorm(x, ln1_g[l], ln1_b[l])
        qkv = jnp.dot(h, wqkv[l], preferred_element_type=jnp.float32) + bqkv[l]
        a = _attention(qkv, mask, D=D, H=H, Dh=Dh, scale=scale)
        x = x + jnp.dot(a, wo[l], preferred_element_type=jnp.float32) + bo[l]
        # ---- MLP block (pre-LN, fused w1 -> quick-gelu -> w2) ----
        h = _layernorm(x, ln2_g[l], ln2_b[l])
        h = jnp.dot(h, w1[l], preferred_element_type=jnp.float32) + b1[l]
        h = h * jax.nn.sigmoid(1.702 * h)                    # CLIP QuickGELU
        x = x + jnp.dot(h, w2[l], preferred_element_type=jnp.float32) + b2[l]
    return x


# --------------------------- fused branch kernels ---------------------------

def _text_encoder_kernel(ids_ref, tok_ref, pos_ref,
                         ln1_g, ln1_b, wqkv, bqkv, wo, bo,
                         ln2_g, ln2_b, w1, b1, w2, b2,
                         fin_g, fin_b, out_ref, *, B, S, H, L, vocab):
    R = B * S
    D = tok_ref.shape[-1]
    # token embedding as a one-hot matmul (MXU-friendly; avoids in-kernel gather)
    # TODO(synk): at CLIP vocab=49408 replace with a scalar-prefetched HBM row
    # gather (memory_space=pl.ANY) — the one-hot is only sensible at vocab=64.
    onehot = (lax.broadcasted_iota(jnp.int32, (R, vocab), 1)
              == ids_ref[...]).astype(jnp.float32)
    x = jnp.dot(onehot, tok_ref[...], preferred_element_type=jnp.float32)
    # broadcast-add the positional embedding over the batch (no concats)
    x = (x.reshape(B, S, D) + pos_ref[...]).reshape(R, D)

    # block-diagonal causal mask generated in-kernel (no mask input DMA):
    # row i attends col j iff same batch block and pos_j <= pos_i.
    # (assumes full-length sequences — no pad-token attention_mask.)
    br, bc, pr, pc = _row_ids(R, S)
    mask = jnp.where((br == bc) & (pc <= pr), 0.0, -1e9).astype(jnp.float32)

    layer_refs = (ln1_g, ln1_b, wqkv, bqkv, wo, bo, ln2_g, ln2_b, w1, b1, w2, b2)
    x = _transformer_layers(x, layer_refs, mask, H=H, L=L)

    x = _layernorm(x, fin_g[...], fin_b[...])                # last_hidden_state
    # fused epilogue: .mean(dim=1) via a cheap sublane-grouping reshape
    out_ref[...] = jnp.mean(x.reshape(B, S, D), axis=1).astype(out_ref.dtype)


def _vision_encoder_kernel(patch_ref, pw_ref, base_ref, pre_g, pre_b,
                           ln1_g, ln1_b, wqkv, bqkv, wo, bo,
                           ln2_g, ln2_b, w1, b1, w2, b2,
                           fin_g, fin_b, out_ref, *, B, S, S_valid, H, L):
    # patch_ref: [B*S, C*P*P] im2col patches, zero rows at the CLS slot and at
    #            the tail padding.
    # base_ref : [S, D] = (class_emb + pos[0], pos[1:], zeros) so that
    #            x = patches @ W + base reproduces CLIP's vision embedding.
    R = B * S
    D = pw_ref.shape[-1]
    x = jnp.dot(patch_ref[...], pw_ref[...], preferred_element_type=jnp.float32)
    x = (x.reshape(B, S, D) + base_ref[...]).reshape(R, D)
    x = _layernorm(x, pre_g[...], pre_b[...])                # CLIP pre_layrnorm

    # block-diagonal padding mask: cross-batch keys and keys beyond the real
    # per-batch sequence (CLS + patches) are disabled.
    br, bc, _pr, pc = _row_ids(R, S)
    mask = jnp.where((br == bc) & (pc < S_valid), 0.0, -1e9).astype(jnp.float32)

    layer_refs = (ln1_g, ln1_b, wqkv, bqkv, wo, bo, ln2_g, ln2_b, w1, b1, w2, b2)
    x = _transformer_layers(x, layer_refs, mask, H=H, L=L)

    x = _layernorm(x, fin_g[...], fin_b[...])                # post_layernorm
    # fused epilogue: pooler_output = post_LN(last_hidden)[:, 0, :]
    out_ref[...] = x.reshape(B, S, D)[:, 0, :].astype(out_ref.dtype)


# --------------------------- forward wrappers -------------------------------

@jax.jit
def text_encoder_forward(params, input_ids):
    B, S = input_ids.shape
    D, H, L = CFG["hidden"], CFG["heads"], CFG["layers"]
    t = params["text"]
    ids = input_ids.reshape(B * S, 1).astype(jnp.int32)
    kernel = functools.partial(_text_encoder_kernel, B=B, S=S, H=H, L=L,
                               vocab=CFG["vocab"])
    # TODO(synk): on v7x only, add grid=(B,) with dimension_semantics=
    # ("parallel",) + per-batch BlockSpecs to shard the batch over both
    # TensorCores; on single-TC v5e/v6e a grid only adds per-step overhead.
    return pl.pallas_call(
        kernel,
        out_shape=jax.ShapeDtypeStruct((B, D), jnp.float32),
    )(ids, t["tok_emb"], t["pos_emb"][:S],
      *[t["layers"][k] for k in LAYER_KEYS],
      t["fin_g"], t["fin_b"])


@jax.jit
def vision_encoder_forward(params, pixel_values):
    B, C, Himg, Wimg = pixel_values.shape
    P, D, H, L = CFG["patch"], CFG["hidden"], CFG["heads"], CFG["layers"]
    v = params["vision"]
    gh, gw = Himg // P, Wimg // P
    NP = gh * gw
    S_valid = NP + 1
    S = ((S_valid + 7) // 8) * 8             # pad seq to a sublane multiple (8)
    # im2col glue: NCHW -> [B, NP, C*P*P] (flatten order (c, kh, kw)); then a
    # zero row at the CLS slot and at the tail padding so that the patch
    # projection, CLS token and positional embedding all fuse into the kernel.
    patches = pixel_values.reshape(B, C, gh, P, gw, P)
    patches = patches.transpose(0, 2, 4, 1, 3, 5).reshape(B, NP, C * P * P)
    patches = jnp.pad(patches, ((0, 0), (1, S - S_valid), (0, 0)))
    patches = patches.reshape(B * S, C * P * P)
    base = jnp.concatenate(
        [v["class_emb"] + v["pos_emb"][:1],          # CLS row (+ its pos emb)
         v["pos_emb"][1:],                           # patch positional embeddings
         jnp.zeros((S - S_valid, D), jnp.float32)],  # padded rows
        axis=0)
    kernel = functools.partial(_vision_encoder_kernel, B=B, S=S,
                               S_valid=S_valid, H=H, L=L)
    return pl.pallas_call(
        kernel,
        out_shape=jax.ShapeDtypeStruct((B, D), jnp.float32),
    )(patches, v["patch_w"], base, v["pre_g"], v["pre_b"],
      *[v["layers"][k] for k in LAYER_KEYS],
      v["fin_g"], v["fin_b"])


def style_encoder_forward(params, style_prompt, prompt_type):
    # TODO(synk): CLIPTokenizer / CLIPProcessor preprocessing (string
    # tokenization, image resize/normalize) has no Pallas equivalent; inputs
    # must be pre-tokenized ids / pre-normalized NCHW pixel tensors.
    if prompt_type == "text":
        return text_encoder_forward(params, style_prompt)
    elif prompt_type == "image":
        return vision_encoder_forward(params, style_prompt)
    else:
        raise ValueError(f"Unsupported prompt type: {prompt_type}")


# --------------------------- params -----------------------------------------

def _init_layer_stack(key, L, D, MLP):
    ks = jax.random.split(key, 4)
    s = 0.02
    return {
        "ln1_g": jnp.ones((L, 1, D), jnp.float32),
        "ln1_b": jnp.zeros((L, 1, D), jnp.float32),
        "wqkv": s * jax.random.normal(ks[0], (L, D, 3 * D), jnp.float32),
        "bqkv": jnp.zeros((L, 1, 3 * D), jnp.float32),
        "wo": s * jax.random.normal(ks[1], (L, D, D), jnp.float32),
        "bo": jnp.zeros((L, 1, D), jnp.float32),
        "ln2_g": jnp.ones((L, 1, D), jnp.float32),
        "ln2_b": jnp.zeros((L, 1, D), jnp.float32),
        "w1": s * jax.random.normal(ks[2], (L, D, MLP), jnp.float32),
        "b1": jnp.zeros((L, 1, MLP), jnp.float32),
        "w2": s * jax.random.normal(ks[3], (L, MLP, D), jnp.float32),
        "b2": jnp.zeros((L, 1, D), jnp.float32),
    }


def init_params(key):
    D, MLP, L = CFG["hidden"], CFG["mlp"], CFG["layers"]
    P, C = CFG["patch"], CFG["channels"]
    NP = (CFG["image_size"] // P) ** 2
    s = 0.02
    kt, kv = jax.random.split(key)
    kts = jax.random.split(kt, 3)
    kvs = jax.random.split(kv, 4)
    text = {
        "tok_emb": s * jax.random.normal(kts[0], (CFG["vocab"], D), jnp.float32),
        "pos_emb": s * jax.random.normal(kts[1], (CFG["max_text_len"], D), jnp.float32),
        "layers": _init_layer_stack(kts[2], L, D, MLP),
        "fin_g": jnp.ones((1, D), jnp.float32),
        "fin_b": jnp.zeros((1, D), jnp.float32),
    }
    vision = {
        "class_emb": s * jax.random.normal(kvs[0], (1, D), jnp.float32),
        # conv weight [D, C, P, P] flattened (c, kh, kw)-major -> [C*P*P, D];
        # CLIP's patch conv has bias=False.
        "patch_w": s * jax.random.normal(kvs[1], (C * P * P, D), jnp.float32),
        "pos_emb": s * jax.random.normal(kvs[2], (NP + 1, D), jnp.float32),
        "pre_g": jnp.ones((1, D), jnp.float32),
        "pre_b": jnp.zeros((1, D), jnp.float32),
        "layers": _init_layer_stack(kvs[3], L, D, MLP),
        "fin_g": jnp.ones((1, D), jnp.float32),
        "fin_b": jnp.zeros((1, D), jnp.float32),
    }
    return {"text": text, "vision": vision}


# ------------------------------- main ---------------------------------------

if __name__ == "__main__":
    params = init_params(jax.random.PRNGKey(1))

    key = jax.random.PRNGKey(0)
    k_txt, k_img = jax.random.split(key)
    # "text" prompt: already-tokenized ids, batch=2, seq=8
    text_ids = jax.random.randint(k_txt, (2, CFG["max_text_len"]), 0,
                                  CFG["vocab"], jnp.int32)
    # "image" prompt: already-processed pixel values, NCHW [2, 3, 16, 16]
    pixel_values = jax.random.normal(
        k_img, (2, CFG["channels"], CFG["image_size"], CFG["image_size"]),
        jnp.float32)

    txt_feat = style_encoder_forward(params, text_ids, "text")
    img_feat = style_encoder_forward(params, pixel_values, "image")
    jax.block_until_ready(txt_feat)
    jax.block_until_ready(img_feat)

    assert txt_feat.shape == (2, CFG["hidden"])
    assert img_feat.shape == (2, CFG["hidden"])
    assert bool(jnp.all(jnp.isfinite(txt_feat)))
    assert bool(jnp.all(jnp.isfinite(img_feat)))
    print("KERNEL_OK")
</pallas_src>

<mosaic_0001>
module attributes {stable_mosaic.version = 11 : i64} {
  func.func @_text_encoder_kernel(%arg0: memref<16x1xi32, #tpu.memory_space<vmem>>, %arg1: memref<64x32xf32, #tpu.memory_space<vmem>>, %arg2: memref<8x32xf32, #tpu.memory_space<vmem>>, %arg3: memref<2x1x32xf32, #tpu.memory_space<vmem>>, %arg4: memref<2x1x32xf32, #tpu.memory_space<vmem>>, %arg5: memref<2x32x96xf32, #tpu.memory_space<vmem>>, %arg6: memref<2x1x96xf32, #tpu.memory_space<vmem>>, %arg7: memref<2x32x32xf32, #tpu.memory_space<vmem>>, %arg8: memref<2x1x32xf32, #tpu.memory_space<vmem>>, %arg9: memref<2x1x32xf32, #tpu.memory_space<vmem>>, %arg10: memref<2x1x32xf32, #tpu.memory_space<vmem>>, %arg11: memref<2x32x64xf32, #tpu.memory_space<vmem>>, %arg12: memref<2x1x64xf32, #tpu.memory_space<vmem>>, %arg13: memref<2x64x32xf32, #tpu.memory_space<vmem>>, %arg14: memref<2x1x32xf32, #tpu.memory_space<vmem>>, %arg15: memref<1x32xf32, #tpu.memory_space<vmem>>, %arg16: memref<1x32xf32, #tpu.memory_space<vmem>>, %arg17: memref<2x32xf32, #tpu.memory_space<vmem>>) attributes {dimension_semantics = [], scalar_prefetch = 0 : i64, scratch_operands = 0 : i64, tpu.core_type = #tpu.core_type<tc>} {
    %0 = tpu.iota {dimensions = array<i32: 1>} : vector<16x64xi32>
    %c0 = arith.constant 0 : index
    %c0_0 = arith.constant 0 : index
    %1 = vector.load %arg0[%c0, %c0_0] : memref<16x1xi32, #tpu.memory_space<vmem>>, vector<16x1xi32>
    %2 = vector.broadcast %1 : vector<16x1xi32> to vector<16x64xi32>
    %3 = arith.cmpi eq, %0, %2 : vector<16x64xi32>
    %4 = arith.extui %3 : vector<16x64xi1> to vector<16x64xi32>
    %5 = arith.sitofp %4 : vector<16x64xi32> to vector<16x64xf32>
    %c0_1 = arith.constant 0 : index
    %c0_2 = arith.constant 0 : index
    %6 = vector.load %arg1[%c0_1, %c0_2] : memref<64x32xf32, #tpu.memory_space<vmem>>, vector<64x32xf32>
    %cst = arith.constant dense<0.000000e+00> : vector<16x32xf32>
    %7 = tpu.matmul %5, %6, %cst {dimension_numbers = #tpu.dot_dimension_numbers<[1], [0], [0], [1], [0, 0, 1, 1], [], []>} : vector<16x64xf32>, vector<64x32xf32>, vector<16x32xf32> -> vector<16x32xf32>
    %8 = vector.shape_cast %7 : vector<16x32xf32> to vector<2x8x32xf32>
    %c0_3 = arith.constant 0 : index
    %c0_4 = arith.constant 0 : index
    %9 = vector.load %arg2[%c0_3, %c0_4] : memref<8x32xf32, #tpu.memory_space<vmem>>, vector<8x32xf32>
    %10 = vector.shape_cast %9 : vector<8x32xf32> to vector<1x8x32xf32>
    %11 = vector.broadcast %10 : vector<1x8x32xf32> to vector<2x8x32xf32>
    %12 = arith.addf %8, %11 : vector<2x8x32xf32>
    %13 = vector.shape_cast %12 : vector<2x8x32xf32> to vector<16x32xf32>
    %14 = tpu.iota {dimensions = array<i32: 0>} : vector<16x16xi32>
    %15 = tpu.iota {dimensions = array<i32: 1>} : vector<16x16xi32>
    %c3_i32 = arith.constant 3 : i32
    %16 = vector.broadcast %c3_i32 : i32 to vector<16x16xi32>
    %17 = arith.shrsi %14, %16 : vector<16x16xi32>
    %c3_i32_5 = arith.constant 3 : i32
    %18 = vector.broadcast %c3_i32_5 : i32 to vector<16x16xi32>
    %19 = arith.shrsi %15, %18 : vector<16x16xi32>
    %c7_i32 = arith.constant 7 : i32
    %20 = vector.broadcast %c7_i32 : i32 to vector<16x16xi32>
    %21 = arith.andi %14, %20 : vector<16x16xi32>
    %c7_i32_6 = arith.constant 7 : i32
    %22 = vector.broadcast %c7_i32_6 : i32 to vector<16x16xi32>
    %23 = arith.andi %15, %22 : vector<16x16xi32>
    %24 = arith.cmpi eq, %17, %19 : vector<16x16xi32>
    %25 = arith.cmpi sle, %23, %21 : vector<16x16xi32>
    %26 = arith.andi %24, %25 : vector<16x16xi1>
    %cst_7 = arith.constant 0.000000e+00 : f32
    %cst_8 = arith.constant -1.000000e+09 : f32
    %27 = vector.broadcast %cst_7 : f32 to vector<16x16xf32>
    %28 = vector.broadcast %cst_8 : f32 to vector<16x16xf32>
    %29 = arith.select %26, %27, %28 : vector<16x16xi1>, vector<16x16xf32>
    %c0_9 = arith.constant 0 : index
    %c0_10 = arith.constant 0 : index
    %c0_11 = arith.constant 0 : index
    %30 = vector.load %arg3[%c0_9, %c0_10, %c0_11] : memref<2x1x32xf32, #tpu.memory_space<vmem>>, vector<1x1x32xf32>
    %31 = vector.shape_cast %30 : vector<1x1x32xf32> to vector<1x32xf32>
    %c0_12 = arith.constant 0 : index
    %c0_13 = arith.constant 0 : index
    %c0_14 = arith.constant 0 : index
    %32 = vector.load %arg4[%c0_12, %c0_13, %c0_14] : memref<2x1x32xf32, #tpu.memory_space<vmem>>, vector<1x1x32xf32>
    %33 = vector.shape_cast %32 : vector<1x1x32xf32> to vector<1x32xf32>
    %cst_15 = arith.constant dense<0.000000e+00> : vector<16xf32>
    %34 = vector.multi_reduction <add>, %13, %cst_15 [1] : vector<16x32xf32> to vector<16xf32>
    %35 = vector.shape_cast %34 : vector<16xf32> to vector<16x1xf32>
    %cst_16 = arith.constant 3.200000e+01 : f32
    %36 = vector.broadcast %cst_16 : f32 to vector<16x1xf32>
    %37 = arith.divf %35, %36 : vector<16x1xf32>
    %38 = vector.broadcast %37 : vector<16x1xf32> to vector<16x32xf32>
    %39 = arith.subf %13, %38 : vector<16x32xf32>
    %40 = arith.mulf %39, %39 : vector<16x32xf32>
    %cst_17 = arith.constant dense<0.000000e+00> : vector<16xf32>
    %41 = vector.multi_reduction <add>, %40, %cst_17 [1] : vector<16x32xf32> to vector<16xf32>
    %42 = vector.shape_cast %41 : vector<16xf32> to vector<16x1xf32>
    %cst_18 = arith.constant 3.200000e+01 : f32
    %43 = vector.broadcast %cst_18 : f32 to vector<16x1xf32>
    %44 = arith.divf %42, %43 : vector<16x1xf32>
    %45 = vector.broadcast %37 : vector<16x1xf32> to vector<16x32xf32>
    %46 = arith.subf %13, %45 : vector<16x32xf32>
    %cst_19 = arith.constant 9.99999974E-6 : f32
    %47 = vector.broadcast %cst_19 : f32 to vector<16x1xf32>
    %48 = arith.addf %44, %47 : vector<16x1xf32>
    %49 = math.rsqrt %48 : vector<16x1xf32>
    %50 = vector.broadcast %49 : vector<16x1xf32> to vector<16x32xf32>
    %51 = arith.mulf %46, %50 : vector<16x32xf32>
    %52 = vector.broadcast %31 : vector<1x32xf32> to vector<16x32xf32>
    %53 = arith.mulf %51, %52 : vector<16x32xf32>
    %54 = vector.broadcast %33 : vector<1x32xf32> to vector<16x32xf32>
    %55 = arith.addf %53, %54 : vector<16x32xf32>
    %c0_20 = arith.constant 0 : index
    %c0_21 = arith.constant 0 : index
    %c0_22 = arith.constant 0 : index
    %56 = vector.load %arg5[%c0_20, %c0_21, %c0_22] : memref<2x32x96xf32, #tpu.memory_space<vmem>>, vector<1x32x96xf32>
    %57 = vector.shape_cast %56 : vector<1x32x96xf32> to vector<32x96xf32>
    %cst_23 = arith.constant dense<0.000000e+00> : vector<16x96xf32>
    %58 = tpu.matmul %55, %57, %cst_23 {dimension_numbers = #tpu.dot_dimension_numbers<[1], [0], [0], [1], [0, 0, 1, 1], [], []>} : vector<16x32xf32>, vector<32x96xf32>, vector<16x96xf32> -> vector<16x96xf32>
    %c0_24 = arith.constant 0 : index
    %c0_25 = arith.constant 0 : index
    %c0_26 = arith.constant 0 : index
    %59 = vector.load %arg6[%c0_24, %c0_25, %c0_26] : memref<2x1x96xf32, #tpu.memory_space<vmem>>, vector<1x1x96xf32>
    %60 = vector.shape_cast %59 : vector<1x1x96xf32> to vector<1x96xf32>
    %61 = vector.broadcast %60 : vector<1x96xf32> to vector<16x96xf32>
    %62 = arith.addf %58, %61 : vector<16x96xf32>
    %63 = vector.extract_strided_slice %62 {offsets = [0, 0], sizes = [16, 16], strides = [1, 1]} : vector<16x96xf32> to vector<16x16xf32>
    %cst_27 = arith.constant 2.500000e-01 : f32
    %64 = vector.broadcast %cst_27 : f32 to vector<16x16xf32>
    %65 = arith.mulf %63, %64 : vector<16x16xf32>
    %66 = vector.extract_strided_slice %62 {offsets = [0, 32], sizes = [16, 16], strides = [1, 1]} : vector<16x96xf32> to vector<16x16xf32>
    %67 = vector.extract_strided_slice %62 {offsets = [0, 64], sizes = [16, 16], strides = [1, 1]} : vector<16x96xf32> to vector<16x16xf32>
    %cst_28 = arith.constant dense<0.000000e+00> : vector<16x16xf32>
    %68 = tpu.matmul %65, %66, %cst_28 {dimension_numbers = #tpu.dot_dimension_numbers<[1], [1], [0], [0], [0, 0, 1, 0], [], []>} : vector<16x16xf32>, vector<16x16xf32>, vector<16x16xf32> -> vector<16x16xf32>
    %69 = arith.addf %68, %29 : vector<16x16xf32>
    %70 = math.exp %69 : vector<16x16xf32>
    %cst_29 = arith.constant dense<0.000000e+00> : vector<16xf32>
    %71 = vector.multi_reduction <add>, %70, %cst_29 [1] : vector<16x16xf32> to vector<16xf32>
    %72 = vector.shape_cast %71 : vector<16xf32> to vector<16x1xf32>
    %73 = tpu.reciprocal %72 : vector<16x1xf32> -> vector<16x1xf32>
    %74 = vector.broadcast %73 : vector<16x1xf32> to vector<16x16xf32>
    %75 = arith.mulf %70, %74 : vector<16x16xf32>
    %cst_30 = arith.constant dense<0.000000e+00> : vector<16x16xf32>
    %76 = tpu.matmul %75, %67, %cst_30 {dimension_numbers = #tpu.dot_dimension_numbers<[1], [0], [0], [1], [0, 0, 1, 1], [], []>} : vector<16x16xf32>, vector<16x16xf32>, vector<16x16xf32> -> vector<16x16xf32>
    %77 = vector.extract_strided_slice %62 {offsets = [0, 16], sizes = [16, 16], strides = [1, 1]} : vector<16x96xf32> to vector<16x16xf32>
    %cst_31 = arith.constant 2.500000e-01 : f32
    %78 = vector.broadcast %cst_31 : f32 to vector<16x16xf32>
    %79 = arith.mulf %77, %78 : vector<16x16xf32>
    %80 = vector.extract_strided_slice %62 {offsets = [0, 48], sizes = [16, 16], strides = [1, 1]} : vector<16x96xf32> to vector<16x16xf32>
    %81 = vector.extract_strided_slice %62 {offsets = [0, 80], sizes = [16, 16], strides = [1, 1]} : vector<16x96xf32> to vector<16x16xf32>
    %cst_32 = arith.constant dense<0.000000e+00> : vector<16x16xf32>
    %82 = tpu.matmul %79, %80, %cst_32 {dimension_numbers = #tpu.dot_dimension_numbers<[1], [1], [0], [0], [0, 0, 1, 0], [], []>} : vector<16x16xf32>, vector<16x16xf32>, vector<16x16xf32> -> vector<16x16xf32>
    %83 = arith.addf %82, %29 : vector<16x16xf32>
    %84 = math.exp %83 : vector<16x16xf32>
    %cst_33 = arith.constant dense<0.000000e+00> : vector<16xf32>
    %85 = vector.multi_reduction <add>, %84, %cst_33 [1] : vector<16x16xf32> to vector<16xf32>
    %86 = vector.shape_cast %85 : vector<16xf32> to vector<16x1xf32>
    %87 = tpu.reciprocal %86 : vector<16x1xf32> -> vector<16x1xf32>
    %88 = vector.broadcast %87 : vector<16x1xf32> to vector<16x16xf32>
    %89 = arith.mulf %84, %88 : vector<16x16xf32>
    %cst_34 = arith.constant dense<0.000000e+00> : vector<16x16xf32>
    %90 = tpu.matmul %89, %81, %cst_34 {dimension_numbers = #tpu.dot_dimension_numbers<[1], [0], [0], [1], [0, 0, 1, 1], [], []>} : vector<16x16xf32>, vector<16x16xf32>, vector<16x16xf32> -> vector<16x16xf32>
    %91 = tpu.concatenate %76, %90 in 1 : vector<16x16xf32>, vector<16x16xf32> -> vector<16x32xf32>
    %c0_35 = arith.constant 0 : index
    %c0_36 = arith.constant 0 : index
    %c0_37 = arith.constant 0 : index
    %92 = vector.load %arg7[%c0_35, %c0_36, %c0_37] : memref<2x32x32xf32, #tpu.memory_space<vmem>>, vector<1x32x32xf32>
    %93 = vector.shape_cast %92 : vector<1x32x32xf32> to vector<32x32xf32>
    %cst_38 = arith.constant dense<0.000000e+00> : vector<16x32xf32>
    %94 = tpu.matmul %91, %93, %cst_38 {dimension_numbers = #tpu.dot_dimension_numbers<[1], [0], [0], [1], [0, 0, 1, 1], [], []>} : vector<16x32xf32>, vector<32x32xf32>, vector<16x32xf32> -> vector<16x32xf32>
    %95 = arith.addf %13, %94 : vector<16x32xf32>
    %c0_39 = arith.constant 0 : index
    %c0_40 = arith.constant 0 : index
    %c0_41 = arith.constant 0 : index
    %96 = vector.load %arg8[%c0_39, %c0_40, %c0_41] : memref<2x1x32xf32, #tpu.memory_space<vmem>>, vector<1x1x32xf32>
    %97 = vector.shape_cast %96 : vector<1x1x32xf32> to vector<1x32xf32>
    %98 = vector.broadcast %97 : vector<1x32xf32> to vector<16x32xf32>
    %99 = arith.addf %95, %98 : vector<16x32xf32>
    %c0_42 = arith.constant 0 : index
    %c0_43 = arith.constant 0 : index
    %c0_44 = arith.constant 0 : index
    %100 = vector.load %arg9[%c0_42, %c0_43, %c0_44] : memref<2x1x32xf32, #tpu.memory_space<vmem>>, vector<1x1x32xf32>
    %101 = vector.shape_cast %100 : vector<1x1x32xf32> to vector<1x32xf32>
    %c0_45 = arith.constant 0 : index
    %c0_46 = arith.constant 0 : index
    %c0_47 = arith.constant 0 : index
    %102 = vector.load %arg10[%c0_45, %c0_46, %c0_47] : memref<2x1x32xf32, #tpu.memory_space<vmem>>, vector<1x1x32xf32>
    %103 = vector.shape_cast %102 : vector<1x1x32xf32> to vector<1x32xf32>
    %cst_48 = arith.constant dense<0.000000e+00> : vector<16xf32>
    %104 = vector.multi_reduction <add>, %99, %cst_48 [1] : vector<16x32xf32> to vector<16xf32>
    %105 = vector.shape_cast %104 : vector<16xf32> to vector<16x1xf32>
    %cst_49 = arith.constant 3.200000e+01 : f32
    %106 = vector.broadcast %cst_49 : f32 to vector<16x1xf32>
    %107 = arith.divf %105, %106 : vector<16x1xf32>
    %108 = vector.broadcast %107 : vector<16x1xf32> to vector<16x32xf32>
    %109 = arith.subf %99, %108 : vector<16x32xf32>
    %110 = arith.mulf %109, %109 : vector<16x32xf32>
    %cst_50 = arith.constant dense<0.000000e+00> : vector<16xf32>
    %111 = vector.multi_reduction <add>, %110, %cst_50 [1] : vector<16x32xf32> to vector<16xf32>
    %112 = vector.shape_cast %111 : vector<16xf32> to vector<16x1xf32>
    %cst_51 = arith.constant 3.200000e+01 : f32
    %113 = vector.broadcast %cst_51 : f32 to vector<16x1xf32>
    %114 = arith.divf %112, %113 : vector<16x1xf32>
    %115 = vector.broadcast %107 : vector<16x1xf32> to vector<16x32xf32>
    %116 = arith.subf %99, %115 : vector<16x32xf32>
    %cst_52 = arith.constant 9.99999974E-6 : f32
    %117 = vector.broadcast %cst_52 : f32 to vector<16x1xf32>
    %118 = arith.addf %114, %117 : vector<16x1xf32>
    %119 = math.rsqrt %118 : vector<16x1xf32>
    %120 = vector.broadcast %119 : vector<16x1xf32> to vector<16x32xf32>
    %121 = arith.mulf %116, %120 : vector<16x32xf32>
    %122 = vector.broadcast %101 : vector<1x32xf32> to vector<16x32xf32>
    %123 = arith.mulf %121, %122 : vector<16x32xf32>
    %124 = vector.broadcast %103 : vector<1x32xf32> to vector<16x32xf32>
    %125 = arith.addf %123, %124 : vector<16x32xf32>
    %c0_53 = arith.constant 0 : index
    %c0_54 = arith.constant 0 : index
    %c0_55 = arith.constant 0 : index
    %126 = vector.load %arg11[%c0_53, %c0_54, %c0_55] : memref<2x32x64xf32, #tpu.memory_space<vmem>>, vector<1x32x64xf32>
    %127 = vector.shape_cast %126 : vector<1x32x64xf32> to vector<32x64xf32>
    %cst_56 = arith.constant dense<0.000000e+00> : vector<16x64xf32>
    %128 = tpu.matmul %125, %127, %cst_56 {dimension_numbers = #tpu.dot_dimension_numbers<[1], [0], [0], [1], [0, 0, 1, 1], [], []>} : vector<16x32xf32>, vector<32x64xf32>, vector<16x64xf32> -> vector<16x64xf32>
    %c0_57 = arith.constant 0 : index
    %c0_58 = arith.constant 0 : index
    %c0_59 = arith.constant 0 : index
    %129 = vector.load %arg12[%c0_57, %c0_58, %c0_59] : memref<2x1x64xf32, #tpu.memory_space<vmem>>, vector<1x1x64xf32>
    %130 = vector.shape_cast %129 : vector<1x1x64xf32> to vector<1x64xf32>
    %131 = vector.broadcast %130 : vector<1x64xf32> to vector<16x64xf32>
    %132 = arith.addf %128, %131 : vector<16x64xf32>
    %cst_60 = arith.constant 1.702000e+00 : f32
    %133 = vector.broadcast %cst_60 : f32 to vector<16x64xf32>
    %134 = arith.mulf %133, %132 : vector<16x64xf32>
    %135 = arith.negf %134 : vector<16x64xf32>
    %136 = math.exp %135 : vector<16x64xf32>
    %cst_61 = arith.constant 1.000000e+00 : f32
    %137 = vector.broadcast %cst_61 : f32 to vector<16x64xf32>
    %138 = arith.addf %137, %136 : vector<16x64xf32>
    %139 = arith.divf %137, %138 : vector<16x64xf32>
    %140 = arith.mulf %132, %139 : vector<16x64xf32>
    %c0_62 = arith.constant 0 : index
    %c0_63 = arith.constant 0 : index
    %c0_64 = arith.constant 0 : index
    %141 = vector.load %arg13[%c0_62, %c0_63, %c0_64] : memref<2x64x32xf32, #tpu.memory_space<vmem>>, vector<1x64x32xf32>
    %142 = vector.shape_cast %141 : vector<1x64x32xf32> to vector<64x32xf32>
    %cst_65 = arith.constant dense<0.000000e+00> : vector<16x32xf32>
    %143 = tpu.matmul %140, %142, %cst_65 {dimension_numbers = #tpu.dot_dimension_numbers<[1], [0], [0], [1], [0, 0, 1, 1], [], []>} : vector<16x64xf32>, vector<64x32xf32>, vector<16x32xf32> -> vector<16x32xf32>
    %144 = arith.addf %99, %143 : vector<16x32xf32>
    %c0_66 = arith.constant 0 : index
    %c0_67 = arith.constant 0 : index
    %c0_68 = arith.constant 0 : index
    %145 = vector.load %arg14[%c0_66, %c0_67, %c0_68] : memref<2x1x32xf32, #tpu.memory_space<vmem>>, vector<1x1x32xf32>
    %146 = vector.shape_cast %145 : vector<1x1x32xf32> to vector<1x32xf32>
    %147 = vector.broadcast %146 : vector<1x32xf32> to vector<16x32xf32>
    %148 = arith.addf %144, %147 : vector<16x32xf32>
    %c1 = arith.constant 1 : index
    %c0_69 = arith.constant 0 : index
    %c0_70 = arith.constant 0 : index
    %149 = vector.load %arg3[%c1, %c0_69, %c0_70] : memref<2x1x32xf32, #tpu.memory_space<vmem>>, vector<1x1x32xf32>
    %150 = vector.shape_cast %149 : vector<1x1x32xf32> to vector<1x32xf32>
    %c1_71 = arith.constant 1 : index
    %c0_72 = arith.constant 0 : index
    %c0_73 = arith.constant 0 : index
    %151 = vector.load %arg4[%c1_71, %c0_72, %c0_73] : memref<2x1x32xf32, #tpu.memory_space<vmem>>, vector<1x1x32xf32>
    %152 = vector.shape_cast %151 : vector<1x1x32xf32> to vector<1x32xf32>
    %cst_74 = arith.constant dense<0.000000e+00> : vector<16xf32>
    %153 = vector.multi_reduction <add>, %148, %cst_74 [1] : vector<16x32xf32> to vector<16xf32>
    %154 = vector.shape_cast %153 : vector<16xf32> to vector<16x1xf32>
    %cst_75 = arith.constant 3.200000e+01 : f32
    %155 = vector.broadcast %cst_75 : f32 to vector<16x1xf32>
    %156 = arith.divf %154, %155 : vector<16x1xf32>
    %157 = vector.broadcast %156 : vector<16x1xf32> to vector<16x32xf32>
    %158 = arith.subf %148, %157 : vector<16x32xf32>
    %159 = arith.mulf %158, %158 : vector<16x32xf32>
    %cst_76 = arith.constant dense<0.000000e+00> : vector<16xf32>
    %160 = vector.multi_reduction <add>, %159, %cst_76 [1] : vector<16x32xf32> to vector<16xf32>
    %161 = vector.shape_cast %160 : vector<16xf32> to vector<16x1xf32>
    %cst_77 = arith.constant 3.200000e+01 : f32
    %162 = vector.broadcast %cst_77 : f32 to vector<16x1xf32>
    %163 = arith.divf %161, %162 : vector<16x1xf32>
    %164 = vector.broadcast %156 : vector<16x1xf32> to vector<16x32xf32>
    %165 = arith.subf %148, %164 : vector<16x32xf32>
    %cst_78 = arith.constant 9.99999974E-6 : f32
    %166 = vector.broadcast %cst_78 : f32 to vector<16x1xf32>
    %167 = arith.addf %163, %166 : vector<16x1xf32>
    %168 = math.rsqrt %167 : vector<16x1xf32>
    %169 = vector.broadcast %168 : vector<16x1xf32> to vector<16x32xf32>
    %170 = arith.mulf %165, %169 : vector<16x32xf32>
    %171 = vector.broadcast %150 : vector<1x32xf32> to vector<16x32xf32>
    %172 = arith.mulf %170, %171 : vector<16x32xf32>
    %173 = vector.broadcast %152 : vector<1x32xf32> to vector<16x32xf32>
    %174 = arith.addf %172, %173 : vector<16x32xf32>
    %c1_79 = arith.constant 1 : index
    %c0_80 = arith.constant 0 : index
    %c0_81 = arith.constant 0 : index
    %175 = vector.load %arg5[%c1_79, %c0_80, %c0_81] : memref<2x32x96xf32, #tpu.memory_space<vmem>>, vector<1x32x96xf32>
    %176 = vector.shape_cast %175 : vector<1x32x96xf32> to vector<32x96xf32>
    %cst_82 = arith.constant dense<0.000000e+00> : vector<16x96xf32>
    %177 = tpu.matmul %174, %176, %cst_82 {dimension_numbers = #tpu.dot_dimension_numbers<[1], [0], [0], [1], [0, 0, 1, 1], [], []>} : vector<16x32xf32>, vector<32x96xf32>, vector<16x96xf32> -> vector<16x96xf32>
    %c1_83 = arith.constant 1 : index
    %c0_84 = arith.constant 0 : index
    %c0_85 = arith.constant 0 : index
    %178 = vector.load %arg6[%c1_83, %c0_84, %c0_85] : memref<2x1x96xf32, #tpu.memory_space<vmem>>, vector<1x1x96xf32>
    %179 = vector.shape_cast %178 : vector<1x1x96xf32> to vector<1x96xf32>
    %180 = vector.broadcast %179 : vector<1x96xf32> to vector<16x96xf32>
    %181 = arith.addf %177, %180 : vector<16x96xf32>
    %182 = vector.extract_strided_slice %181 {offsets = [0, 0], sizes = [16, 16], strides = [1, 1]} : vector<16x96xf32> to vector<16x16xf32>
    %cst_86 = arith.constant 2.500000e-01 : f32
    %183 = vector.broadcast %cst_86 : f32 to vector<16x16xf32>
    %184 = arith.mulf %182, %183 : vector<16x16xf32>
    %185 = vector.extract_strided_slice %181 {offsets = [0, 32], sizes = [16, 16], strides = [1, 1]} : vector<16x96xf32> to vector<16x16xf32>
    %186 = vector.extract_strided_slice %181 {offsets = [0, 64], sizes = [16, 16], strides = [1, 1]} : vector<16x96xf32> to vector<16x16xf32>
    %cst_87 = arith.constant dense<0.000000e+00> : vector<16x16xf32>
    %187 = tpu.matmul %184, %185, %cst_87 {dimension_numbers = #tpu.dot_dimension_numbers<[1], [1], [0], [0], [0, 0, 1, 0], [], []>} : vector<16x16xf32>, vector<16x16xf32>, vector<16x16xf32> -> vector<16x16xf32>
    %188 = arith.addf %187, %29 : vector<16x16xf32>
    %189 = math.exp %188 : vector<16x16xf32>
    %cst_88 = arith.constant dense<0.000000e+00> : vector<16xf32>
    %190 = vector.multi_reduction <add>, %189, %cst_88 [1] : vector<16x16xf32> to vector<16xf32>
    %191 = vector.shape_cast %190 : vector<16xf32> to vector<16x1xf32>
    %192 = tpu.reciprocal %191 : vector<16x1xf32> -> vector<16x1xf32>
    %193 = vector.broadcast %192 : vector<16x1xf32> to vector<16x16xf32>
    %194 = arith.mulf %189, %193 : vector<16x16xf32>
    %cst_89 = arith.constant dense<0.000000e+00> : vector<16x16xf32>
    %195 = tpu.matmul %194, %186, %cst_89 {dimension_numbers = #tpu.dot_dimension_numbers<[1], [0], [0], [1], [0, 0, 1, 1], [], []>} : vector<16x16xf32>, vector<16x16xf32>, vector<16x16xf32> -> vector<16x16xf32>
    %196 = vector.extract_strided_slice %181 {offsets = [0, 16], sizes = [16, 16], strides = [1, 1]} : vector<16x96xf32> to vector<16x16xf32>
    %cst_90 = arith.constant 2.500000e-01 : f32
    %197 = vector.broadcast %cst_90 : f32 to vector<16x16xf32>
    %198 = arith.mulf %196, %197 : vector<16x16xf32>
    %199 = vector.extract_strided_slice %181 {offsets = [0, 48], sizes = [16, 16], strides = [1, 1]} : vector<16x96xf32> to vector<16x16xf32>
    %200 = vector.extract_strided_slice %181 {offsets = [0, 80], sizes = [16, 16], strides = [1, 1]} : vector<16x96xf32> to vector<16x16xf32>
    %cst_91 = arith.constant dense<0.000000e+00> : vector<16x16xf32>
    %201 = tpu.matmul %198, %199, %cst_91 {dimension_numbers = #tpu.dot_dimension_numbers<[1], [1], [0], [0], [0, 0, 1, 0], [], []>} : vector<16x16xf32>, vector<16x16xf32>, vector<16x16xf32> -> vector<16x16xf32>
    %202 = arith.addf %201, %29 : vector<16x16xf32>
    %203 = math.exp %202 : vector<16x16xf32>
    %cst_92 = arith.constant dense<0.000000e+00> : vector<16xf32>
    %204 = vector.multi_reduction <add>, %203, %cst_92 [1] : vector<16x16xf32> to vector<16xf32>
    %205 = vector.shape_cast %204 : vector<16xf32> to vector<16x1xf32>
    %206 = tpu.reciprocal %205 : vector<16x1xf32> -> vector<16x1xf32>
    %207 = vector.broadcast %206 : vector<16x1xf32> to vector<16x16xf32>
    %208 = arith.mulf %203, %207 : vector<16x16xf32>
    %cst_93 = arith.constant dense<0.000000e+00> : vector<16x16xf32>
    %209 = tpu.matmul %208, %200, %cst_93 {dimension_numbers = #tpu.dot_dimension_numbers<[1], [0], [0], [1], [0, 0, 1, 1], [], []>} : vector<16x16xf32>, vector<16x16xf32>, vector<16x16xf32> -> vector<16x16xf32>
    %210 = tpu.concatenate %195, %209 in 1 : vector<16x16xf32>, vector<16x16xf32> -> vector<16x32xf32>
    %c1_94 = arith.constant 1 : index
    %c0_95 = arith.constant 0 : index
    %c0_96 = arith.constant 0 : index
    %211 = vector.load %arg7[%c1_94, %c0_95, %c0_96] : memref<2x32x32xf32, #tpu.memory_space<vmem>>, vector<1x32x32xf32>
    %212 = vector.shape_cast %211 : vector<1x32x32xf32> to vector<32x32xf32>
    %cst_97 = arith.constant dense<0.000000e+00> : vector<16x32xf32>
    %213 = tpu.matmul %210, %212, %cst_97 {dimension_numbers = #tpu.dot_dimension_numbers<[1], [0], [0], [1], [0, 0, 1, 1], [], []>} : vector<16x32xf32>, vector<32x32xf32>, vector<16x32xf32> -> vector<16x32xf32>
    %214 = arith.addf %148, %213 : vector<16x32xf32>
    %c1_98 = arith.constant 1 : index
    %c0_99 = arith.constant 0 : index
    %c0_100 = arith.constant 0 : index
    %215 = vector.load %arg8[%c1_98, %c0_99, %c0_100] : memref<2x1x32xf32, #tpu.memory_space<vmem>>, vector<1x1x32xf32>
    %216 = vector.shape_cast %215 : vector<1x1x32xf32> to vector<1x32xf32>
    %217 = vector.broadcast %216 : vector<1x32xf32> to vector<16x32xf32>
    %218 = arith.addf %214, %217 : vector<16x32xf32>
    %c1_101 = arith.constant 1 : index
    %c0_102 = arith.constant 0 : index
    %c0_103 = arith.constant 0 : index
    %219 = vector.load %arg9[%c1_101, %c0_102, %c0_103] : memref<2x1x32xf32, #tpu.memory_space<vmem>>, vector<1x1x32xf32>
    %220 = vector.shape_cast %219 : vector<1x1x32xf32> to vector<1x32xf32>
    %c1_104 = arith.constant 1 : index
    %c0_105 = arith.constant 0 : index
    %c0_106 = arith.constant 0 : index
    %221 = vector.load %arg10[%c1_104, %c0_105, %c0_106] : memref<2x1x32xf32, #tpu.memory_space<vmem>>, vector<1x1x32xf32>
    %222 = vector.shape_cast %221 : vector<1x1x32xf32> to vector<1x32xf32>
    %cst_107 = arith.constant dense<0.000000e+00> : vector<16xf32>
    %223 = vector.multi_reduction <add>, %218, %cst_107 [1] : vector<16x32xf32> to vector<16xf32>
    %224 = vector.shape_cast %223 : vector<16xf32> to vector<16x1xf32>
    %cst_108 = arith.constant 3.200000e+01 : f32
    %225 = vector.broadcast %cst_108 : f32 to vector<16x1xf32>
    %226 = arith.divf %224, %225 : vector<16x1xf32>
    %227 = vector.broadcast %226 : vector<16x1xf32> to vector<16x32xf32>
    %228 = arith.subf %218, %227 : vector<16x32xf32>
    %229 = arith.mulf %228, %228 : vector<16x32xf32>
    %cst_109 = arith.constant dense<0.000000e+00> : vector<16xf32>
    %230 = vector.multi_reduction <add>, %229, %cst_109 [1] : vector<16x32xf32> to vector<16xf32>
    %231 = vector.shape_cast %230 : vector<16xf32> to vector<16x1xf32>
    %cst_110 = arith.constant 3.200000e+01 : f32
    %232 = vector.broadcast %cst_110 : f32 to vector<16x1xf32>
    %233 = arith.divf %231, %232 : vector<16x1xf32>
    %234 = vector.broadcast %226 : vector<16x1xf32> to vector<16x32xf32>
    %235 = arith.subf %218, %234 : vector<16x32xf32>
    %cst_111 = arith.constant 9.99999974E-6 : f32
    %236 = vector.broadcast %cst_111 : f32 to vector<16x1xf32>
    %237 = arith.addf %233, %236 : vector<16x1xf32>
    %238 = math.rsqrt %237 : vector<16x1xf32>
    %239 = vector.broadcast %238 : vector<16x1xf32> to vector<16x32xf32>
    %240 = arith.mulf %235, %239 : vector<16x32xf32>
    %241 = vector.broadcast %220 : vector<1x32xf32> to vector<16x32xf32>
    %242 = arith.mulf %240, %241 : vector<16x32xf32>
    %243 = vector.broadcast %222 : vector<1x32xf32> to vector<16x32xf32>
    %244 = arith.addf %242, %243 : vector<16x32xf32>
    %c1_112 = arith.constant 1 : index
    %c0_113 = arith.constant 0 : index
    %c0_114 = arith.constant 0 : index
    %245 = vector.load %arg11[%c1_112, %c0_113, %c0_114] : memref<2x32x64xf32, #tpu.memory_space<vmem>>, vector<1x32x64xf32>
    %246 = vector.shape_cast %245 : vector<1x32x64xf32> to vector<32x64xf32>
    %cst_115 = arith.constant dense<0.000000e+00> : vector<16x64xf32>
    %247 = tpu.matmul %244, %246, %cst_115 {dimension_numbers = #tpu.dot_dimension_numbers<[1], [0], [0], [1], [0, 0, 1, 1], [], []>} : vector<16x32xf32>, vector<32x64xf32>, vector<16x64xf32> -> vector<16x64xf32>
    %c1_116 = arith.constant 1 : index
    %c0_117 = arith.constant 0 : index
    %c0_118 = arith.constant 0 : index
    %248 = vector.load %arg12[%c1_116, %c0_117, %c0_118] : memref<2x1x64xf32, #tpu.memory_space<vmem>>, vector<1x1x64xf32>
    %249 = vector.shape_cast %248 : vector<1x1x64xf32> to vector<1x64xf32>
    %250 = vector.broadcast %249 : vector<1x64xf32> to vector<16x64xf32>
    %251 = arith.addf %247, %250 : vector<16x64xf32>
    %cst_119 = arith.constant 1.702000e+00 : f32
    %252 = vector.broadcast %cst_119 : f32 to vector<16x64xf32>
    %253 = arith.mulf %252, %251 : vector<16x64xf32>
    %254 = arith.negf %253 : vector<16x64xf32>
    %255 = math.exp %254 : vector<16x64xf32>
    %cst_120 = arith.constant 1.000000e+00 : f32
    %256 = vector.broadcast %cst_120 : f32 to vector<16x64xf32>
    %257 = arith.addf %256, %255 : vector<16x64xf32>
    %258 = arith.divf %256, %257 : vector<16x64xf32>
    %259 = arith.mulf %251, %258 : vector<16x64xf32>
    %c1_121 = arith.constant 1 : index
    %c0_122 = arith.constant 0 : index
    %c0_123 = arith.constant 0 : index
    %260 = vector.load %arg13[%c1_121, %c0_122, %c0_123] : memref<2x64x32xf32, #tpu.memory_space<vmem>>, vector<1x64x32xf32>
    %261 = vector.shape_cast %260 : vector<1x64x32xf32> to vector<64x32xf32>
    %cst_124 = arith.constant dense<0.000000e+00> : vector<16x32xf32>
    %262 = tpu.matmul %259, %261, %cst_124 {dimension_numbers = #tpu.dot_dimension_numbers<[1], [0], [0], [1], [0, 0, 1, 1], [], []>} : vector<16x64xf32>, vector<64x32xf32>, vector<16x32xf32> -> vector<16x32xf32>
    %263 = arith.addf %218, %262 : vector<16x32xf32>
    %c1_125 = arith.constant 1 : index
    %c0_126 = arith.constant 0 : index
    %c0_127 = arith.constant 0 : index
    %264 = vector.load %arg14[%c1_125, %c0_126, %c0_127] : memref<2x1x32xf32, #tpu.memory_space<vmem>>, vector<1x1x32xf32>
    %265 = vector.shape_cast %264 : vector<1x1x32xf32> to vector<1x32xf32>
    %266 = vector.broadcast %265 : vector<1x32xf32> to vector<16x32xf32>
    %267 = arith.addf %263, %266 : vector<16x32xf32>
    %c0_128 = arith.constant 0 : index
    %c0_129 = arith.constant 0 : index
    %268 = vector.load %arg15[%c0_128, %c0_129] : memref<1x32xf32, #tpu.memory_space<vmem>>, vector<1x32xf32>
    %c0_130 = arith.constant 0 : index
    %c0_131 = arith.constant 0 : index
    %269 = vector.load %arg16[%c0_130, %c0_131] : memref<1x32xf32, #tpu.memory_space<vmem>>, vector<1x32xf32>
    %cst_132 = arith.constant dense<0.000000e+00> : vector<16xf32>
    %270 = vector.multi_reduction <add>, %267, %cst_132 [1] : vector<16x32xf32> to vector<16xf32>
    %271 = vector.shape_cast %270 : vector<16xf32> to vector<16x1xf32>
    %cst_133 = arith.constant 3.200000e+01 : f32
    %272 = vector.broadcast %cst_133 : f32 to vector<16x1xf32>
    %273 = arith.divf %271, %272 : vector<16x1xf32>
    %274 = vector.broadcast %273 : vector<16x1xf32> to vector<16x32xf32>
    %275 = arith.subf %267, %274 : vector<16x32xf32>
    %276 = arith.mulf %275, %275 : vector<16x32xf32>
    %cst_134 = arith.constant dense<0.000000e+00> : vector<16xf32>
    %277 = vector.multi_reduction <add>, %276, %cst_134 [1] : vector<16x32xf32> to vector<16xf32>
    %278 = vector.shape_cast %277 : vector<16xf32> to vector<16x1xf32>
    %cst_135 = arith.constant 3.200000e+01 : f32
    %279 = vector.broadcast %cst_135 : f32 to vector<16x1xf32>
    %280 = arith.divf %278, %279 : vector<16x1xf32>
    %281 = vector.broadcast %273 : vector<16x1xf32> to vector<16x32xf32>
    %282 = arith.subf %267, %281 : vector<16x32xf32>
    %cst_136 = arith.constant 9.99999974E-6 : f32
    %283 = vector.broadcast %cst_136 : f32 to vector<16x1xf32>
    %284 = arith.addf %280, %283 : vector<16x1xf32>
    %285 = math.rsqrt %284 : vector<16x1xf32>
    %286 = vector.broadcast %285 : vector<16x1xf32> to vector<16x32xf32>
    %287 = arith.mulf %282, %286 : vector<16x32xf32>
    %288 = vector.broadcast %268 : vector<1x32xf32> to vector<16x32xf32>
    %289 = arith.mulf %287, %288 : vector<16x32xf32>
    %290 = vector.broadcast %269 : vector<1x32xf32> to vector<16x32xf32>
    %291 = arith.addf %289, %290 : vector<16x32xf32>
    %292 = vector.shape_cast %291 : vector<16x32xf32> to vector<2x8x32xf32>
    %cst_137 = arith.constant dense<0.000000e+00> : vector<2x32xf32>
    %293 = vector.multi_reduction <add>, %292, %cst_137 [1] : vector<2x8x32xf32> to vector<2x32xf32>
    %cst_138 = arith.constant 8.000000e+00 : f32
    %294 = vector.broadcast %cst_138 : f32 to vector<2x32xf32>
    %295 = arith.divf %293, %294 : vector<2x32xf32>
    %c0_139 = arith.constant 0 : index
    %c0_140 = arith.constant 0 : index
    %296 = vector.load %arg17[%c0_139, %c0_140] : memref<2x32xf32, #tpu.memory_space<vmem>>, vector<2x32xf32>
    tpu.vector_store %arg17[%c0_139, %c0_140], %295 {strides = array<i32>} : memref<2x32xf32, #tpu.memory_space<vmem>>, vector<2x32xf32>,
    return
  }
}

</mosaic_0001>

<llo_original>
// kernel: text_encoder_forward.1
$region0: #{text_encoder_forward.1}
  #allocation0 [shape = 'u32[]', space=smem, size = 0x4, offset = 0x4, fixed_abs, tag = 'smem constant byte address 0x4 - core index']
  #allocation1 [shape = 'u32[144,128]{1,0:T(1,128)}', space=vmem, size = 0x12000, scoped, tag = 'internal scratch']
  %s0 = inlined_call_operand.vmem [shape: s32[16,1], index: 0, kind: input, shape index: {}]
  %s1 = inlined_call_operand.vmem [shape: f32[64,32], index: 1, kind: input, shape index: {}]
  %s2 = inlined_call_operand.vmem [shape: f32[8,32], index: 2, kind: input, shape index: {}]
  %s3 = inlined_call_operand.vmem [shape: f32[2,1,32], index: 3, kind: input, shape index: {}]
  %s4 = inlined_call_operand.vmem [shape: f32[2,1,32], index: 4, kind: input, shape index: {}]
  %s5 = inlined_call_operand.vmem [shape: f32[2,32,96], index: 5, kind: input, shape index: {}]
  %s6 = inlined_call_operand.vmem [shape: f32[2,1,96], index: 6, kind: input, shape index: {}]
  %s7 = inlined_call_operand.vmem [shape: f32[2,32,32], index: 7, kind: input, shape index: {}]
  %s8 = inlined_call_operand.vmem [shape: f32[2,1,32], index: 8, kind: input, shape index: {}]
  %s9 = inlined_call_operand.vmem [shape: f32[2,1,32], index: 9, kind: input, shape index: {}]
  %s10 = inlined_call_operand.vmem [shape: f32[2,1,32], index: 10, kind: input, shape index: {}]
  %s11 = inlined_call_operand.vmem [shape: f32[2,32,64], index: 11, kind: input, shape index: {}]
  %s12 = inlined_call_operand.vmem [shape: f32[2,1,64], index: 12, kind: input, shape index: {}]
  %s13 = inlined_call_operand.vmem [shape: f32[2,64,32], index: 13, kind: input, shape index: {}]
  %s14 = inlined_call_operand.vmem [shape: f32[2,1,32], index: 14, kind: input, shape index: {}]
  %s15 = inlined_call_operand.vmem [shape: f32[1,32], index: 15, kind: input, shape index: {}]
  %s16 = inlined_call_operand.vmem [shape: f32[1,32], index: 16, kind: input, shape index: {}]
  %s17 = inlined_call_operand.hbm [shape: f32[2,32], index: 17, kind: output, shape index: {}]
  %s18 = sld [smem:[#allocation0]]
  $region78: #{text_encoder_forward.1} parent=0
    _
  %s20 = ssub.s32 1, %s18
  %s21 = scalar_select 0, %s20, %s18
  $region1: #{text_encoder_forward.1} parent=0
    #allocation2 [shape = 'u8[1024]{0}', space=vmem, size = 0x400, scoped, tag = 'output window, operand 0, single buffered']
    #allocation3 [shape = 's32[1]{0}', space=sflag, size = 0x4, scoped, tag = 'scoped memory for text_encoder_forward.1']
    %22 = vsyncpa [#allocation3], 0
    // Predicated region
    $region2: #{text_encoder_forward.1} parent=1 // pred_check
      _
    $region3: #{text_encoder_forward.1} parent=1 // pred_check_branch
      %24 = sbr.rel (0) target = $region5
    $region4: #{text_encoder_forward.1} parent=1 // pred_region
      _
    $region5: #{text_encoder_forward.1} parent=1 // pred_fallthru
      _
    // Predicated region
    $region6: #{text_encoder_forward.1} parent=1 // pred_check
      _
    $region7: #{text_encoder_forward.1} parent=1 // pred_check_branch
      %26 = sbr.rel (0) target = $region9
    $region8: #{text_encoder_forward.1} parent=1 // pred_region
      _
    $region9: #{text_encoder_forward.1} parent=1 // pred_fallthru
      _
    // Predicated region
    $region10: #{text_encoder_forward.1} parent=1 // pred_check
      _
    $region11: #{text_encoder_forward.1} parent=1 // pred_check_branch
      %28 = sbr.rel (0) target = $region13
    $region12: #{text_encoder_forward.1} parent=1 // pred_region
      _
    $region13: #{text_encoder_forward.1} parent=1 // pred_fallthru
      _
    // Predicated region
    $region14: #{text_encoder_forward.1} parent=1 // pred_check
      _
    $region15: #{text_encoder_forward.1} parent=1 // pred_check_branch
      %30 = sbr.rel (0) target = $region17
    $region16: #{text_encoder_forward.1} parent=1 // pred_region
      _
    $region17: #{text_encoder_forward.1} parent=1 // pred_fallthru
      _
    // Predicated region
    $region18: #{text_encoder_forward.1} parent=1 // pred_check
      _
    $region19: #{text_encoder_forward.1} parent=1 // pred_check_branch
      %32 = sbr.rel (0) target = $region21
    $region20: #{text_encoder_forward.1} parent=1 // pred_region
      _
    $region21: #{text_encoder_forward.1} parent=1 // pred_fallthru
      _
    // Predicated region
    $region22: #{text_encoder_forward.1} parent=1 // pred_check
      _
    $region23: #{text_encoder_forward.1} parent=1 // pred_check_branch
      %34 = sbr.rel (0) target = $region25
    $region24: #{text_encoder_forward.1} parent=1 // pred_region
      _
    $region25: #{text_encoder_forward.1} parent=1 // pred_fallthru
      _
    // Predicated region
    $region26: #{text_encoder_forward.1} parent=1 // pred_check
      _
    $region27: #{text_encoder_forward.1} parent=1 // pred_check_branch
      %36 = sbr.rel (0) target = $region29
    $region28: #{text_encoder_forward.1} parent=1 // pred_region
      _
    $region29: #{text_encoder_forward.1} parent=1 // pred_fallthru
      _
    // Predicated region
    $region30: #{text_encoder_forward.1} parent=1 // pred_check
      _
    $region31: #{text_encoder_forward.1} parent=1 // pred_check_branch
      %38 = sbr.rel (0) target = $region33
    $region32: #{text_encoder_forward.1} parent=1 // pred_region
      _
    $region33: #{text_encoder_forward.1} parent=1 // pred_fallthru
      _
    // Predicated region
    $region34: #{text_encoder_forward.1} parent=1 // pred_check
      _
    $region35: #{text_encoder_forward.1} parent=1 // pred_check_branch
      %40 = sbr.rel (0) target = $region37
    $region36: #{text_encoder_forward.1} parent=1 // pred_region
      _
    $region37: #{text_encoder_forward.1} parent=1 // pred_fallthru
      _
    // Predicated region
    $region38: #{text_encoder_forward.1} parent=1 // pred_check
      _
    $region39: #{text_encoder_forward.1} parent=1 // pred_check_branch
      %42 = sbr.rel (0) target = $region41
    $region40: #{text_encoder_forward.1} parent=1 // pred_region
      _
    $region41: #{text_encoder_forward.1} parent=1 // pred_fallthru
      _
    // Predicated region
    $region42: #{text_encoder_forward.1} parent=1 // pred_check
      _
    $region43: #{text_encoder_forward.1} parent=1 // pred_check_branch
      %44 = sbr.rel (0) target = $region45
    $region44: #{text_encoder_forward.1} parent=1 // pred_region
      _
    $region45: #{text_encoder_forward.1} parent=1 // pred_fallthru
      _
    // Predicated region
    $region46: #{text_encoder_forward.1} parent=1 // pred_check
      _
    $region47: #{text_encoder_forward.1} parent=1 // pred_check_branch
      %46 = sbr.rel (0) target = $region49
    $region48: #{text_encoder_forward.1} parent=1 // pred_region
      _
    $region49: #{text_encoder_forward.1} parent=1 // pred_fallthru
      _
    // Predicated region
    $region50: #{text_encoder_forward.1} parent=1 // pred_check
      _
    $region51: #{text_encoder_forward.1} parent=1 // pred_check_branch
      %48 = sbr.rel (0) target = $region53
    $region52: #{text_encoder_forward.1} parent=1 // pred_region
      _
    $region53: #{text_encoder_forward.1} parent=1 // pred_fallthru
      _
    // Predicated region
    $region54: #{text_encoder_forward.1} parent=1 // pred_check
      _
    $region55: #{text_encoder_forward.1} parent=1 // pred_check_branch
      %50 = sbr.rel (0) target = $region57
    $region56: #{text_encoder_forward.1} parent=1 // pred_region
      _
    $region57: #{text_encoder_forward.1} parent=1 // pred_fallthru
      _
    // Predicated region
    $region58: #{text_encoder_forward.1} parent=1 // pred_check
      _
    $region59: #{text_encoder_forward.1} parent=1 // pred_check_branch
      %52 = sbr.rel (0) target = $region61
    $region60: #{text_encoder_forward.1} parent=1 // pred_region
      _
    $region61: #{text_encoder_forward.1} parent=1 // pred_fallthru
      _
    // Predicated region
    $region62: #{text_encoder_forward.1} parent=1 // pred_check
      _
    $region63: #{text_encoder_forward.1} parent=1 // pred_check_branch
      %54 = sbr.rel (0) target = $region65
    $region64: #{text_encoder_forward.1} parent=1 // pred_region
      _
    $region65: #{text_encoder_forward.1} parent=1 // pred_fallthru
      _
    // Predicated region
    $region66: #{text_encoder_forward.1} parent=1 // pred_check
      _
    $region67: #{text_encoder_forward.1} parent=1 // pred_check_branch
      %56 = sbr.rel (0) target = $region69
    $region68: #{text_encoder_forward.1} parent=1 // pred_region
      _
    $region69: #{text_encoder_forward.1} parent=1 // pred_fallthru
      _
    %v57 = vlaneseq
    %v58 = vand.u32 %v57, 127
    %v59 = vld [vmem:[%s0] sm:$0xff]
    %v60 = vld [vmem:[%s0 + $0x8] sm:$0xff]
    %61 = vset.pattern.permute.xlu0 0
    %62 = vperm.xlu0 %61, %v59
    %v63 = vpop.permute.xlu0 %62
    %64 = vset.pattern.permute.xlu0 0
    %65 = vperm.xlu0 %64, %v60
    %v66 = vpop.permute.xlu0 %65
    %vm67 = vcmp.eq.s32.totalorder %v58, %v63
    %vm68 = vcmp.eq.s32.totalorder %v58, %v66
    %v69 = vsel %vm67, 1, 0
    %v70 = vsel %vm68, 1, 0
    %v71 = vcvt.s32.f32 %v69
    %v72 = vcvt.s32.f32 %v70
    %v73 = vld [vmem:[%s1] sm:$0xff]
    %v74 = vld [vmem:[%s1 + $0x8] sm:$0xff]
    %v75 = vld [vmem:[%s1 + $0x10] sm:$0xff]
    %v76 = vld [vmem:[%s1 + $0x18] sm:$0xff]
    %v77 = vld [vmem:[%s1 + $0x20] sm:$0xff]
    %v78 = vld [vmem:[%s1 + $0x28] sm:$0xff]
    %v79 = vld [vmem:[%s1 + $0x30] sm:$0xff]
    %v80 = vld [vmem:[%s1 + $0x38] sm:$0xff]
    %vm81 = vcmask 523264
    %v83 = vsel %vm81, %v71, 0
    %v86 = vsel %vm81, %v72, 0
    %88 = vmatprep.subr.mxu0 0.0
    %89 = vmatpush1.msra.mxu0 %v73
    %90 = vmatprep.subr.mxu0 0.0
    %91 = vmatpush1.msra.mxu0 %v74
    %92 = vmatprep.subr.mxu0 0.0
    %93 = vmatpush1.msra.mxu0 %v75
    %94 = vmatprep.subr.mxu0 0.0
    %95 = vmatpush1.msra.mxu0 %v76
    %96 = vmatprep.subr.mxu0 0.0
    %97 = vmatpush1.msra.mxu0 %v77
    %98 = vmatprep.subr.mxu0 0.0
    %99 = vmatpush1.msra.mxu0 %v78
    %100 = vmatprep.subr.mxu0 0.0
    %101 = vmatpush1.msra.mxu0 %v79
    %102 = vmatprep.subr.mxu0 0.0
    %103 = vmatpush1.msra.mxu0 %v80
    %104 = vmatprep.subr.mxu0 0.0
    %105 = vmatpush1.msra.mxu0 0.0
    %106 = vmatprep.subr.mxu0 0.0
    %107 = vmatpush1.msra.mxu0 0.0
    %108 = vmatprep.subr.mxu0 0.0
    %109 = vmatpush1.msra.mxu0 0.0
    %110 = vmatprep.subr.mxu0 0.0
    %111 = vmatpush1.msra.mxu0 0.0
    %112 = vmatprep.subr.mxu0 0.0
    %113 = vmatpush1.msra.mxu0 0.0
    %114 = vmatprep.subr.mxu0 0.0
    %115 = vmatpush1.msra.mxu0 0.0
    %116 = vmatprep.subr.mxu0 0.0
    %117 = vmatpush1.msra.mxu0 0.0
    %118 = vmatprep.subr.mxu0 0.0
    %119 = vmatpush1.msra.mxu0 0.0
    %120 = vmatprep.subr.mxu0 0.0
    %121 = vmatpush1.msra.mxu0 0.0
    %122 = vmatprep.subr.mxu0 0.0
    %123 = vmatpush1.msra.mxu0 0.0
    %124 = vmatprep.subr.mxu0 0.0
    %125 = vmatpush1.msra.mxu0 0.0
    %126 = vmatprep.subr.mxu0 0.0
    %127 = vmatpush1.msra.mxu0 0.0
    %128 = vmatprep.subr.mxu0 0.0
    %129 = vmatpush1.msra.mxu0 0.0
    %130 = vmatprep.subr.mxu0 0.0
    %131 = vmatpush1.msra.mxu0 0.0
    %132 = vmatprep.subr.mxu0 0.0
    %133 = vmatpush1.msra.mxu0 0.0
    %134 = vmatprep.subr.mxu0 0.0
    %135 = vmatpush1.msra.mxu0 0.0
    %136 = vmatprep.subr.mxu0 0.0
    %137 = vmatpush1.msra.mxu0 0.0
    %138 = vmatprep.subr.mxu0 0.0
    %139 = vmatpush1.msra.mxu0 0.0
    %140 = vmatprep.subr.mxu0 0.0
    %141 = vmatpush1.msra.mxu0 0.0
    %142 = vmatprep.subr.mxu0 0.0
    %143 = vmatpush1.msra.mxu0 0.0
    %144 = vmatprep.subr.mxu0 0.0
    %145 = vmatpush1.msra.mxu0 0.0
    %146 = vmatprep.subr.mxu0 0.0
    %147 = vmatpush1.msra.mxu0 0.0
    %148 = vmatprep.subr.mxu0 0.0
    %149 = vmatpush1.msra.mxu0 0.0
    %150 = vmatprep.subr.mxu0 0.0
    %151 = vmatpush1.msra.mxu0 0.0
    %152 = vmatprep.mubr.f32.mxu0 0.0
    %153 = vmatmul.mubr.f32.gmra.mrb[0].mxu0 %v83
    %v154 = vpop.f32.mrb[0].mxu0
    %v155 = vadd.f32 0.0, %v154
    %v156 = vpop.f32.mrb[0].mxu0
    %157 = vmatprep.mubr.f32.mxu0 0.0
    %158 = vmatmul.mubr.f32.gmra.mrb[0].mxu0 %v86
    %v159 = vpop.f32.mrb[0].mxu0
    %v160 = vadd.f32 0.0, %v159
    %v161 = vpop.f32.mrb[0].mxu0
    %162 = vdwg.mxu0
    %v163 = vld [vmem:[%s2] sm:$0xff]
    %v164 = vadd.f32 %v155, %v163
    %v165 = vadd.f32 %v160, %v163
    %v166 = vlaneseq
    %v167 = vshrl.u32 %v166, 7
    %v168 = vadd.s32 %v167, 8
    %v169 = vshra.s32 %v167, 3
    %v170 = vshra.s32 %v168, 3
    %v171 = vshra.s32 %v58, 3
    %v172 = vand.u32 %v167, 7
    %v173 = vand.u32 %v168, 7
    %v174 = vand.u32 %v58, 7
    %vm175 = vcmp.eq.s32.totalorder %v169, %v171
    %vm176 = vcmp.eq.s32.totalorder %v170, %v171
    %vm177 = vcmp.le.s32.totalorder %v174, %v172
    %vm178 = vcmp.le.s32.totalorder %v174, %v173
    %vm179 = vmand %vm175, %vm177
    %vm180 = vmand %vm176, %vm178
    %v181 = vsel %vm179, 0.0, -1e+09
    %v182 = vsel %vm180, 0.0, -1e+09
    %v183 = vld [vmem:[%s3] sm:$0x1]
    %v184 = vld [vmem:[%s4] sm:$0x1]
    %vm185 = vcmask 261120
    %v186 = vsel %vm185, %v164, 0.0
    %187 = vadd.xlane.f32.xlu0 %v186
    %v188 = vpop.xlane.xlu0 %187
    %v189 = vsel %vm185, %v165, 0.0
    %190 = vadd.xlane.f32.xlu0 %v189
    %v191 = vpop.xlane.xlu0 %190
    %v192 = vrcp.pop 32.0
    %v193 = vmul.f32 %v188, %v192
    %v194 = vmul.f32 %v191, %v192
    %v195 = vsub.f32 %v164, %v193
    %v196 = vsub.f32 %v165, %v194
    %v197 = vmul.f32 %v195, %v195
    %v198 = vmul.f32 %v196, %v196
    %v199 = vsel %vm185, %v197, 0.0
    %200 = vadd.xlane.f32.xlu0 %v199
    %v201 = vpop.xlane.xlu0 %200
    %v202 = vsel %vm185, %v198, 0.0
    %203 = vadd.xlane.f32.xlu0 %v202
    %v204 = vpop.xlane.xlu0 %203
    %v205 = vmul.f32 %v201, %v192
    %v206 = vmul.f32 %v204, %v192
    %v207 = vadd.f32 %v205, 1e-05
    %v208 = vadd.f32 %v206, 1e-05
    %v209 = vrsqrt.pop %v207
    %v210 = vrsqrt.pop %v208
    %v211 = vmul.f32 %v195, %v209
    %v212 = vmul.f32 %v196, %v210
    %v214 = vlaneseq
    %v215 = vshrl.u32 %v214, 7
    %v216 = vsub.s32 0, %v215
    %v217 = vrot.slane %v183, %v216
    %v219 = vmul.f32 %v211, %v217
    %v220 = vmul.f32 %v212, %v217
    %v222 = vlaneseq
    %v223 = vshrl.u32 %v222, 7
    %v224 = vsub.s32 0, %v223
    %v225 = vrot.slane %v184, %v224
    %v227 = vadd.f32 %v219, %v225
    %v228 = vadd.f32 %v220, %v225
    %v229 = vld [vmem:[%s5] sm:$0xff]
    %v230 = vld [vmem:[%s5 + $0x8] sm:$0xff]
    %v231 = vld [vmem:[%s5 + $0x10] sm:$0xff]
    %v232 = vld [vmem:[%s5 + $0x18] sm:$0xff]
    %v233 = vld [vmem:[%s6] sm:$0x1]
    %v235 = vlaneseq
    %v236 = vshrl.u32 %v235, 7
    %v237 = vsub.s32 0, %v236
    %v238 = vrot.slane %v233, %v237
    %v241 = vsel %vm185, %v227, 0
    %v244 = vsel %vm185, %v228, 0
    %246 = vmatprep.subr.mxu0 0.0
    %247 = vmatpush1.msra.mxu0 %v229
    %248 = vmatprep.subr.mxu0 0.0
    %249 = vmatpush1.msra.mxu0 %v230
    %250 = vmatprep.subr.mxu0 0.0
    %251 = vmatpush1.msra.mxu0 %v231
    %252 = vmatprep.subr.mxu0 0.0
    %253 = vmatpush1.msra.mxu0 %v232
    %254 = vmatprep.subr.mxu0 0.0
    %255 = vmatpush1.msra.mxu0 0.0
    %256 = vmatprep.subr.mxu0 0.0
    %257 = vmatpush1.msra.mxu0 0.0
    %258 = vmatprep.subr.mxu0 0.0
    %259 = vmatpush1.msra.mxu0 0.0
    %260 = vmatprep.subr.mxu0 0.0
    %261 = vmatpush1.msra.mxu0 0.0
    %262 = vmatprep.subr.mxu0 0.0
    %263 = vmatpush1.msra.mxu0 0.0
    %264 = vmatprep.subr.mxu0 0.0
    %265 = vmatpush1.msra.mxu0 0.0
    %266 = vmatprep.subr.mxu0 0.0
    %267 = vmatpush1.msra.mxu0 0.0
    %268 = vmatprep.subr.mxu0 0.0
    %269 = vmatpush1.msra.mxu0 0.0
    %270 = vmatprep.subr.mxu0 0.0
    %271 = vmatpush1.msra.mxu0 0.0
    %272 = vmatprep.subr.mxu0 0.0
    %273 = vmatpush1.msra.mxu0 0.0
    %274 = vmatprep.subr.mxu0 0.0
    %275 = vmatpush1.msra.mxu0 0.0
    %276 = vmatprep.subr.mxu0 0.0
    %277 = vmatpush1.msra.mxu0 0.0
    %278 = vmatprep.subr.mxu0 0.0
    %279 = vmatpush1.msra.mxu0 0.0
    %280 = vmatprep.subr.mxu0 0.0
    %281 = vmatpush1.msra.mxu0 0.0
    %282 = vmatprep.subr.mxu0 0.0
    %283 = vmatpush1.msra.mxu0 0.0
    %284 = vmatprep.subr.mxu0 0.0
    %285 = vmatpush1.msra.mxu0 0.0
    %286 = vmatprep.subr.mxu0 0.0
    %287 = vmatpush1.msra.mxu0 0.0
    %288 = vmatprep.subr.mxu0 0.0
    %289 = vmatpush1.msra.mxu0 0.0
    %290 = vmatprep.subr.mxu0 0.0
    %291 = vmatpush1.msra.mxu0 0.0
    %292 = vmatprep.subr.mxu0 0.0
    %293 = vmatpush1.msra.mxu0 0.0
    %294 = vmatprep.subr.mxu0 0.0
    %295 = vmatpush1.msra.mxu0 0.0
    %296 = vmatprep.subr.mxu0 0.0
    %297 = vmatpush1.msra.mxu0 0.0
    %298 = vmatprep.subr.mxu0 0.0
    %299 = vmatpush1.msra.mxu0 0.0
    %300 = vmatprep.subr.mxu0 0.0
    %301 = vmatpush1.msra.mxu0 0.0
    %302 = vmatprep.subr.mxu0 0.0
    %303 = vmatpush1.msra.mxu0 0.0
    %304 = vmatprep.subr.mxu0 0.0
    %305 = vmatpush1.msra.mxu0 0.0
    %306 = vmatprep.subr.mxu0 0.0
    %307 = vmatpush1.msra.mxu0 0.0
    %308 = vmatprep.subr.mxu0 0.0
    %309 = vmatpush1.msra.mxu0 0.0
    %310 = vmatprep.mubr.f32.mxu0 0.0
    %311 = vmatmul.mubr.f32.gmra.mrb[0].mxu0 %v241
    %v312 = vpop.f32.mrb[0].mxu0
    %v313 = vadd.f32 %v238, %v312
    %v314 = vpop.f32.mrb[0].mxu0
    %315 = vmatprep.mubr.f32.mxu0 0.0
    %316 = vmatmul.mubr.f32.gmra.mrb[0].mxu0 %v244
    %v317 = vpop.f32.mrb[0].mxu0
    %v318 = vadd.f32 %v238, %v317
    %v319 = vpop.f32.mrb[0].mxu0
    %320 = vdwg.mxu0
    %v321 = vmul.f32 %v313, 0.25
    %v322 = vmul.f32 %v318, 0.25
    %325 = vrot.lane.b32.xlu0 %v313, 96
    %v326 = vpop.permute.xlu0 %325
    %327 = vrot.lane.b32.xlu0 %v318, 96
    %v328 = vpop.permute.xlu0 %327
    %vm329 = vcmask 130048
    %v331 = vsel %vm329, %v321, 0
    %v334 = vsel %vm329, %v322, 0
    %v336 = vsel %vm329, %v326, 0
    %v338 = vsel %vm329, %v328, 0
    %340 = vmatprep.subr.mxu0 0.0
    %341 = vmatpush1.xpose.msra.mxu0 %v336
    %342 = vmatprep.subr.mxu0 0.0
    %343 = vmatpush1.xpose.msra.mxu0 %v338
    %344 = vmatprep.subr.mxu0 0.0
    %345 = vmatpush1.xpose.msra.mxu0 0.0
    %346 = vmatprep.subr.mxu0 0.0
    %347 = vmatpush1.xpose.msra.mxu0 0.0
    %348 = vmatprep.subr.mxu0 0.0
    %349 = vmatpush1.xpose.msra.mxu0 0.0
    %350 = vmatprep.subr.mxu0 0.0
    %351 = vmatpush1.xpose.msra.mxu0 0.0
    %352 = vmatprep.subr.mxu0 0.0
    %353 = vmatpush1.xpose.msra.mxu0 0.0
    %354 = vmatprep.subr.mxu0 0.0
    %355 = vmatpush1.xpose.msra.mxu0 0.0
    %356 = vmatprep.subr.mxu0 0.0
    %357 = vmatpush1.xpose.msra.mxu0 0.0
    %358 = vmatprep.subr.mxu0 0.0
    %359 = vmatpush1.xpose.msra.mxu0 0.0
    %360 = vmatprep.subr.mxu0 0.0
    %361 = vmatpush1.xpose.msra.mxu0 0.0
    %362 = vmatprep.subr.mxu0 0.0
    %363 = vmatpush1.xpose.msra.mxu0 0.0
    %364 = vmatprep.subr.mxu0 0.0
    %365 = vmatpush1.xpose.msra.mxu0 0.0
    %366 = vmatprep.subr.mxu0 0.0
    %367 = vmatpush1.xpose.msra.mxu0 0.0
    %368 = vmatprep.subr.mxu0 0.0
    %369 = vmatpush1.xpose.msra.mxu0 0.0
    %370 = vmatprep.subr.mxu0 0.0
    %371 = vmatpush1.xpose.msra.mxu0 0.0
    %372 = vmatprep.subr.mxu0 0.0
    %373 = vmatpush1.xpose.msra.mxu0 0.0
    %374 = vmatprep.subr.mxu0 0.0
    %375 = vmatpush1.xpose.msra.mxu0 0.0
    %376 = vmatprep.subr.mxu0 0.0
    %377 = vmatpush1.xpose.msra.mxu0 0.0
    %378 = vmatprep.subr.mxu0 0.0
    %379 = vmatpush1.xpose.msra.mxu0 0.0
    %380 = vmatprep.subr.mxu0 0.0
    %381 = vmatpush1.xpose.msra.mxu0 0.0
    %382 = vmatprep.subr.mxu0 0.0
    %383 = vmatpush1.xpose.msra.mxu0 0.0
    %384 = vmatprep.subr.mxu0 0.0
    %385 = vmatpush1.xpose.msra.mxu0 0.0
    %386 = vmatprep.subr.mxu0 0.0
    %387 = vmatpush1.xpose.msra.mxu0 0.0
    %388 = vmatprep.subr.mxu0 0.0
    %389 = vmatpush1.xpose.msra.mxu0 0.0
    %390 = vmatprep.subr.mxu0 0.0
    %391 = vmatpush1.xpose.msra.mxu0 0.0
    %392 = vmatprep.subr.mxu0 0.0
    %393 = vmatpush1.xpose.msra.mxu0 0.0
    %394 = vmatprep.subr.mxu0 0.0
    %395 = vmatpush1.xpose.msra.mxu0 0.0
    %396 = vmatprep.subr.mxu0 0.0
    %397 = vmatpush1.xpose.msra.mxu0 0.0
    %398 = vmatprep.subr.mxu0 0.0
    %399 = vmatpush1.xpose.msra.mxu0 0.0
    %400 = vmatprep.subr.mxu0 0.0
    %401 = vmatpush1.xpose.msra.mxu0 0.0
    %402 = vmatprep.subr.mxu0 0.0
    %403 = vmatpush1.xpose.msra.mxu0 0.0
    %404 = vmatprep.mubr.f32.mxu0 0.0
    %405 = vmatmul.mubr.f32.gmra.mrb[0].mxu0 %v331
    %v406 = vpop.f32.mrb[0].mxu0
    %v407 = vadd.f32 %v181, %v406
    %v408 = vpop.f32.mrb[0].mxu0
    %409 = vmatprep.mubr.f32.mxu0 0.0
    %410 = vmatmul.mubr.f32.gmra.mrb[0].mxu0 %v334
    %v411 = vpop.f32.mrb[0].mxu0
    %v412 = vadd.f32 %v182, %v411
    %v413 = vpop.f32.mrb[0].mxu0
    %414 = vdwg.mxu0
    %v415 = vmul.f32 %v407, 1.442695
    %v416 = vpow.pop %v415
    %v417 = vmul.f32 %v412, 1.442695
    %v418 = vpow.pop %v417
    %v419 = vsel %vm329, %v416, 0.0
    %420 = vadd.xlane.f32.xlu0 %v419
    %v421 = vpop.xlane.xlu0 %420
    %v422 = vsel %vm329, %v418, 0.0
    %423 = vadd.xlane.f32.xlu0 %v422
    %v424 = vpop.xlane.xlu0 %423
    %v425 = vrcp.pop %v421
    %v426 = vrcp.pop %v424
    %v427 = vmul.f32 %v416, %v425
    %v428 = vmul.f32 %v418, %v426
    %429 = vrot.lane.b32.xlu0 %v313, 64
    %v430 = vpop.permute.xlu0 %429
    %431 = vrot.lane.b32.xlu0 %v318, 64
    %v432 = vpop.permute.xlu0 %431
    %v436 = vsel %vm329, %v427, 0
    %v439 = vsel %vm329, %v428, 0
    %441 = vmatprep.subr.mxu0 0.0
    %442 = vmatpush1.msra.mxu0 %v430
    %443 = vmatprep.subr.mxu0 0.0
    %444 = vmatpush1.msra.mxu0 %v432
    %445 = vmatprep.subr.mxu0 0.0
    %446 = vmatpush1.msra.mxu0 0.0
    %447 = vmatprep.subr.mxu0 0.0
    %448 = vmatpush1.msra.mxu0 0.0
    %449 = vmatprep.subr.mxu0 0.0
    %450 = vmatpush1.msra.mxu0 0.0
    %451 = vmatprep.subr.mxu0 0.0
    %452 = vmatpush1.msra.mxu0 0.0
    %453 = vmatprep.subr.mxu0 0.0
    %454 = vmatpush1.msra.mxu0 0.0
    %455 = vmatprep.subr.mxu0 0.0
    %456 = vmatpush1.msra.mxu0 0.0
    %457 = vmatprep.subr.mxu0 0.0
    %458 = vmatpush1.msra.mxu0 0.0
    %459 = vmatprep.subr.mxu0 0.0
    %460 = vmatpush1.msra.mxu0 0.0
    %461 = vmatprep.subr.mxu0 0.0
    %462 = vmatpush1.msra.mxu0 0.0
    %463 = vmatprep.subr.mxu0 0.0
    %464 = vmatpush1.msra.mxu0 0.0
    %465 = vmatprep.subr.mxu0 0.0
    %466 = vmatpush1.msra.mxu0 0.0
    %467 = vmatprep.subr.mxu0 0.0
    %468 = vmatpush1.msra.mxu0 0.0
    %469 = vmatprep.subr.mxu0 0.0
    %470 = vmatpush1.msra.mxu0 0.0
    %471 = vmatprep.subr.mxu0 0.0
    %472 = vmatpush1.msra.mxu0 0.0
    %473 = vmatprep.subr.mxu0 0.0
    %474 = vmatpush1.msra.mxu0 0.0
    %475 = vmatprep.subr.mxu0 0.0
    %476 = vmatpush1.msra.mxu0 0.0
    %477 = vmatprep.subr.mxu0 0.0
    %478 = vmatpush1.msra.mxu0 0.0
    %479 = vmatprep.subr.mxu0 0.0
    %480 = vmatpush1.msra.mxu0 0.0
    %481 = vmatprep.subr.mxu0 0.0
    %482 = vmatpush1.msra.mxu0 0.0
    %483 = vmatprep.subr.mxu0 0.0
    %484 = vmatpush1.msra.mxu0 0.0
    %485 = vmatprep.subr.mxu0 0.0
    %486 = vmatpush1.msra.mxu0 0.0
    %487 = vmatprep.subr.mxu0 0.0
    %488 = vmatpush1.msra.mxu0 0.0
    %489 = vmatprep.subr.mxu0 0.0
    %490 = vmatpush1.msra.mxu0 0.0
    %491 = vmatprep.subr.mxu0 0.0
    %492 = vmatpush1.msra.mxu0 0.0
    %493 = vmatprep.subr.mxu0 0.0
    %494 = vmatpush1.msra.mxu0 0.0
    %495 = vmatprep.subr.mxu0 0.0
    %496 = vmatpush1.msra.mxu0 0.0
    %497 = vmatprep.subr.mxu0 0.0
    %498 = vmatpush1.msra.mxu0 0.0
    %499 = vmatprep.subr.mxu0 0.0
    %500 = vmatpush1.msra.mxu0 0.0
    %501 = vmatprep.subr.mxu0 0.0
    %502 = vmatpush1.msra.mxu0 0.0
    %503 = vmatprep.subr.mxu0 0.0
    %504 = vmatpush1.msra.mxu0 0.0
    %505 = vmatprep.mubr.f32.mxu0 0.0
    %506 = vmatmul.mubr.f32.gmra.mrb[0].mxu0 %v436
    %v507 = vpop.f32.mrb[0].mxu0
    %v508 = vadd.f32 0.0, %v507
    %v509 = vpop.f32.mrb[0].mxu0
    %510 = vmatprep.mubr.f32.mxu0 0.0
    %511 = vmatmul.mubr.f32.gmra.mrb[0].mxu0 %v439
    %v512 = vpop.f32.mrb[0].mxu0
    %v513 = vadd.f32 0.0, %v512
    %v514 = vpop.f32.mrb[0].mxu0
    %515 = vdwg.mxu0
    %516 = vrot.lane.b32.xlu0 %v321, 112
    %v517 = vpop.permute.xlu0 %516
    %518 = vrot.lane.b32.xlu0 %v322, 112
    %v519 = vpop.permute.xlu0 %518
    %520 = vrot.lane.b32.xlu0 %v313, 80
    %v521 = vpop.permute.xlu0 %520
    %522 = vrot.lane.b32.xlu0 %v318, 80
    %v523 = vpop.permute.xlu0 %522
    %v524 = vsel %vm329, %v517, 0
    %v526 = vsel %vm329, %v519, 0
    %v528 = vsel %vm329, %v521, 0
    %v530 = vsel %vm329, %v523, 0
    %532 = vmatprep.subr.mxu0 0.0
    %533 = vmatpush1.xpose.msra.mxu0 %v528
    %534 = vmatprep.subr.mxu0 0.0
    %535 = vmatpush1.xpose.msra.mxu0 %v530
    %536 = vmatprep.subr.mxu0 0.0
    %537 = vmatpush1.xpose.msra.mxu0 0.0
    %538 = vmatprep.subr.mxu0 0.0
    %539 = vmatpush1.xpose.msra.mxu0 0.0
    %540 = vmatprep.subr.mxu0 0.0
    %541 = vmatpush1.xpose.msra.mxu0 0.0
    %542 = vmatprep.subr.mxu0 0.0
    %543 = vmatpush1.xpose.msra.mxu0 0.0
    %544 = vmatprep.subr.mxu0 0.0
    %545 = vmatpush1.xpose.msra.mxu0 0.0
    %546 = vmatprep.subr.mxu0 0.0
    %547 = vmatpush1.xpose.msra.mxu0 0.0
    %548 = vmatprep.subr.mxu0 0.0
    %549 = vmatpush1.xpose.msra.mxu0 0.0
    %550 = vmatprep.subr.mxu0 0.0
    %551 = vmatpush1.xpose.msra.mxu0 0.0
    %552 = vmatprep.subr.mxu0 0.0
    %553 = vmatpush1.xpose.msra.mxu0 0.0
    %554 = vmatprep.subr.mxu0 0.0
    %555 = vmatpush1.xpose.msra.mxu0 0.0
    %556 = vmatprep.subr.mxu0 0.0
    %557 = vmatpush1.xpose.msra.mxu0 0.0
    %558 = vmatprep.subr.mxu0 0.0
    %559 = vmatpush1.xpose.msra.mxu0 0.0
    %560 = vmatprep.subr.mxu0 0.0
    %561 = vmatpush1.xpose.msra.mxu0 0.0
    %562 = vmatprep.subr.mxu0 0.0
    %563 = vmatpush1.xpose.msra.mxu0 0.0
    %564 = vmatprep.subr.mxu0 0.0
    %565 = vmatpush1.xpose.msra.mxu0 0.0
    %566 = vmatprep.subr.mxu0 0.0
    %567 = vmatpush1.xpose.msra.mxu0 0.0
    %568 = vmatprep.subr.mxu0 0.0
    %569 = vmatpush1.xpose.msra.mxu0 0.0
    %570 = vmatprep.subr.mxu0 0.0
    %571 = vmatpush1.xpose.msra.mxu0 0.0
    %572 = vmatprep.subr.mxu0 0.0
    %573 = vmatpush1.xpose.msra.mxu0 0.0
    %574 = vmatprep.subr.mxu0 0.0
    %575 = vmatpush1.xpose.msra.mxu0 0.0
    %576 = vmatprep.subr.mxu0 0.0
    %577 = vmatpush1.xpose.msra.mxu0 0.0
    %578 = vmatprep.subr.mxu0 0.0
    %579 = vmatpush1.xpose.msra.mxu0 0.0
    %580 = vmatprep.subr.mxu0 0.0
    %581 = vmatpush1.xpose.msra.mxu0 0.0
    %582 = vmatprep.subr.mxu0 0.0
    %583 = vmatpush1.xpose.msra.mxu0 0.0
    %584 = vmatprep.subr.mxu0 0.0
    %585 = vmatpush1.xpose.msra.mxu0 0.0
    %586 = vmatprep.subr.mxu0 0.0
    %587 = vmatpush1.xpose.msra.mxu0 0.0
    %588 = vmatprep.subr.mxu0 0.0
    %589 = vmatpush1.xpose.msra.mxu0 0.0
    %590 = vmatprep.subr.mxu0 0.0
    %591 = vmatpush1.xpose.msra.mxu0 0.0
    %592 = vmatprep.subr.mxu0 0.0
    %593 = vmatpush1.xpose.msra.mxu0 0.0
    %594 = vmatprep.subr.mxu0 0.0
    %595 = vmatpush1.xpose.msra.mxu0 0.0
    %596 = vmatprep.mubr.f32.mxu0 0.0
    %597 = vmatmul.mubr.f32.gmra.mrb[0].mxu0 %v524
    %v598 = vpop.f32.mrb[0].mxu0
    %v599 = vadd.f32 %v181, %v598
    %v600 = vpop.f32.mrb[0].mxu0
    %601 = vmatprep.mubr.f32.mxu0 0.0
    %602 = vmatmul.mubr.f32.gmra.mrb[0].mxu0 %v526
    %v603 = vpop.f32.mrb[0].mxu0
    %v604 = vadd.f32 %v182, %v603
    %v605 = vpop.f32.mrb[0].mxu0
    %606 = vdwg.mxu0
    %v607 = vmul.f32 %v599, 1.442695
    %v608 = vpow.pop %v607
    %v609 = vmul.f32 %v604, 1.442695
    %v610 = vpow.pop %v609
    %v611 = vsel %vm329, %v608, 0.0
    %612 = vadd.xlane.f32.xlu0 %v611
    %v613 = vpop.xlane.xlu0 %612
    %v614 = vsel %vm329, %v610, 0.0
    %615 = vadd.xlane.f32.xlu0 %v614
    %v616 = vpop.xlane.xlu0 %615
    %v617 = vrcp.pop %v613
    %v618 = vrcp.pop %v616
    %v619 = vmul.f32 %v608, %v617
    %v620 = vmul.f32 %v610, %v618
    %621 = vrot.lane.b32.xlu0 %v313, 48
    %v622 = vpop.permute.xlu0 %621
    %623 = vrot.lane.b32.xlu0 %v318, 48
    %v624 = vpop.permute.xlu0 %623
    %v628 = vsel %vm329, %v619, 0
    %v631 = vsel %vm329, %v620, 0
    %633 = vmatprep.subr.mxu0 0.0
    %634 = vmatpush1.msra.mxu0 %v622
    %635 = vmatprep.subr.mxu0 0.0
    %636 = vmatpush1.msra.mxu0 %v624
    %637 = vmatprep.subr.mxu0 0.0
    %638 = vmatpush1.msra.mxu0 0.0
    %639 = vmatprep.subr.mxu0 0.0
    %640 = vmatpush1.msra.mxu0 0.0
    %641 = vmatprep.subr.mxu0 0.0
    %642 = vmatpush1.msra.mxu0 0.0
    %643 = vmatprep.subr.mxu0 0.0
    %644 = vmatpush1.msra.mxu0 0.0
    %645 = vmatprep.subr.mxu0 0.0
    %646 = vmatpush1.msra.mxu0 0.0
    %647 = vmatprep.subr.mxu0 0.0
    %648 = vmatpush1.msra.mxu0 0.0
    %649 = vmatprep.subr.mxu0 0.0
    %650 = vmatpush1.msra.mxu0 0.0
    %651 = vmatprep.subr.mxu0 0.0
    %652 = vmatpush1.msra.mxu0 0.0
    %653 = vmatprep.subr.mxu0 0.0
    %654 = vmatpush1.msra.mxu0 0.0
    %655 = vmatprep.subr.mxu0 0.0
    %656 = vmatpush1.msra.mxu0 0.0
    %657 = vmatprep.subr.mxu0 0.0
    %658 = vmatpush1.msra.mxu0 0.0
    %659 = vmatprep.subr.mxu0 0.0
    %660 = vmatpush1.msra.mxu0 0.0
    %661 = vmatprep.subr.mxu0 0.0
    %662 = vmatpush1.msra.mxu0 0.0
    %663 = vmatprep.subr.mxu0 0.0
    %664 = vmatpush1.msra.mxu0 0.0
    %665 = vmatprep.subr.mxu0 0.0
    %666 = vmatpush1.msra.mxu0 0.0
    %667 = vmatprep.subr.mxu0 0.0
    %668 = vmatpush1.msra.mxu0 0.0
    %669 = vmatprep.subr.mxu0 0.0
    %670 = vmatpush1.msra.mxu0 0.0
    %671 = vmatprep.subr.mxu0 0.0
    %672 = vmatpush1.msra.mxu0 0.0
    %673 = vmatprep.subr.mxu0 0.0
    %674 = vmatpush1.msra.mxu0 0.0
    %675 = vmatprep.subr.mxu0 0.0
    %676 = vmatpush1.msra.mxu0 0.0
    %677 = vmatprep.subr.mxu0 0.0
    %678 = vmatpush1.msra.mxu0 0.0
    %679 = vmatprep.subr.mxu0 0.0
    %680 = vmatpush1.msra.mxu0 0.0
    %681 = vmatprep.subr.mxu0 0.0
    %682 = vmatpush1.msra.mxu0 0.0
    %683 = vmatprep.subr.mxu0 0.0
    %684 = vmatpush1.msra.mxu0 0.0
    %685 = vmatprep.subr.mxu0 0.0
    %686 = vmatpush1.msra.mxu0 0.0
    %687 = vmatprep.subr.mxu0 0.0
    %688 = vmatpush1.msra.mxu0 0.0
    %689 = vmatprep.subr.mxu0 0.0
    %690 = vmatpush1.msra.mxu0 0.0
    %691 = vmatprep.subr.mxu0 0.0
    %692 = vmatpush1.msra.mxu0 0.0
    %693 = vmatprep.subr.mxu0 0.0
    %694 = vmatpush1.msra.mxu0 0.0
    %695 = vmatprep.subr.mxu0 0.0
    %696 = vmatpush1.msra.mxu0 0.0
    %697 = vmatprep.mubr.f32.mxu0 0.0
    %698 = vmatmul.mubr.f32.gmra.mrb[0].mxu0 %v628
    %v699 = vpop.f32.mrb[0].mxu0
    %v700 = vadd.f32 0.0, %v699
    %v701 = vpop.f32.mrb[0].mxu0
    %702 = vmatprep.mubr.f32.mxu0 0.0
    %703 = vmatmul.mubr.f32.gmra.mrb[0].mxu0 %v631
    %v704 = vpop.f32.mrb[0].mxu0
    %v705 = vadd.f32 0.0, %v704
    %v706 = vpop.f32.mrb[0].mxu0
    %707 = vdwg.mxu0
    %710 = vrot.lane.b32.xlu0 %v700, 16
    %v711 = vpop.permute.xlu0 %710
    %712 = vrot.lane.b32.xlu0 %v705, 16
    %v713 = vpop.permute.xlu0 %712
    %v716 = vsel %vm329, %v508, %v711
    %v717 = vsel %vm329, %v513, %v713
    %v718 = vld [vmem:[%s7] sm:$0xff]
    %v719 = vld [vmem:[%s7 + $0x8] sm:$0xff]
    %v720 = vld [vmem:[%s7 + $0x10] sm:$0xff]
    %v721 = vld [vmem:[%s7 + $0x18] sm:$0xff]
    %v723 = vsel %vm185, %v716, 0
    %v726 = vsel %vm185, %v717, 0
    %728 = vmatprep.subr.mxu0 0.0
    %729 = vmatpush1.msra.mxu0 %v718
    %730 = vmatprep.subr.mxu0 0.0
    %731 = vmatpush1.msra.mxu0 %v719
    %732 = vmatprep.subr.mxu0 0.0
    %733 = vmatpush1.msra.mxu0 %v720
    %734 = vmatprep.subr.mxu0 0.0
    %735 = vmatpush1.msra.mxu0 %v721
    %736 = vmatprep.subr.mxu0 0.0
    %737 = vmatpush1.msra.mxu0 0.0
    %738 = vmatprep.subr.mxu0 0.0
    %739 = vmatpush1.msra.mxu0 0.0
    %740 = vmatprep.subr.mxu0 0.0
    %741 = vmatpush1.msra.mxu0 0.0
    %742 = vmatprep.subr.mxu0 0.0
    %743 = vmatpush1.msra.mxu0 0.0
    %744 = vmatprep.subr.mxu0 0.0
    %745 = vmatpush1.msra.mxu0 0.0
    %746 = vmatprep.subr.mxu0 0.0
    %747 = vmatpush1.msra.mxu0 0.0
    %748 = vmatprep.subr.mxu0 0.0
    %749 = vmatpush1.msra.mxu0 0.0
    %750 = vmatprep.subr.mxu0 0.0
    %751 = vmatpush1.msra.mxu0 0.0
    %752 = vmatprep.subr.mxu0 0.0
    %753 = vmatpush1.msra.mxu0 0.0
    %754 = vmatprep.subr.mxu0 0.0
    %755 = vmatpush1.msra.mxu0 0.0
    %756 = vmatprep.subr.mxu0 0.0
    %757 = vmatpush1.msra.mxu0 0.0
    %758 = vmatprep.subr.mxu0 0.0
    %759 = vmatpush1.msra.mxu0 0.0
    %760 = vmatprep.subr.mxu0 0.0
    %761 = vmatpush1.msra.mxu0 0.0
    %762 = vmatprep.subr.mxu0 0.0
    %763 = vmatpush1.msra.mxu0 0.0
    %764 = vmatprep.subr.mxu0 0.0
    %765 = vmatpush1.msra.mxu0 0.0
    %766 = vmatprep.subr.mxu0 0.0
    %767 = vmatpush1.msra.mxu0 0.0
    %768 = vmatprep.subr.mxu0 0.0
    %769 = vmatpush1.msra.mxu0 0.0
    %770 = vmatprep.subr.mxu0 0.0
    %771 = vmatpush1.msra.mxu0 0.0
    %772 = vmatprep.subr.mxu0 0.0
    %773 = vmatpush1.msra.mxu0 0.0
    %774 = vmatprep.subr.mxu0 0.0
    %775 = vmatpush1.msra.mxu0 0.0
    %776 = vmatprep.subr.mxu0 0.0
    %777 = vmatpush1.msra.mxu0 0.0
    %778 = vmatprep.subr.mxu0 0.0
    %779 = vmatpush1.msra.mxu0 0.0
    %780 = vmatprep.subr.mxu0 0.0
    %781 = vmatpush1.msra.mxu0 0.0
    %782 = vmatprep.subr.mxu0 0.0
    %783 = vmatpush1.msra.mxu0 0.0
    %784 = vmatprep.subr.mxu0 0.0
    %785 = vmatpush1.msra.mxu0 0.0
    %786 = vmatprep.subr.mxu0 0.0
    %787 = vmatpush1.msra.mxu0 0.0
    %788 = vmatprep.subr.mxu0 0.0
    %789 = vmatpush1.msra.mxu0 0.0
    %790 = vmatprep.subr.mxu0 0.0
    %791 = vmatpush1.msra.mxu0 0.0
    %792 = vmatprep.mubr.f32.mxu0 0.0
    %793 = vmatmul.mubr.f32.gmra.mrb[0].mxu0 %v723
    %v794 = vpop.f32.mrb[0].mxu0
    %v795 = vadd.f32 0.0, %v794
    %v796 = vpop.f32.mrb[0].mxu0
    %797 = vmatprep.mubr.f32.mxu0 0.0
    %798 = vmatmul.mubr.f32.gmra.mrb[0].mxu0 %v726
    %v799 = vpop.f32.mrb[0].mxu0
    %v800 = vadd.f32 0.0, %v799
    %v801 = vpop.f32.mrb[0].mxu0
    %802 = vdwg.mxu0
    %v803 = vadd.f32 %v164, %v795
    %v804 = vadd.f32 %v165, %v800
    %v805 = vld [vmem:[%s8] sm:$0x1]
    %v807 = vlaneseq
    %v808 = vshrl.u32 %v807, 7
    %v809 = vsub.s32 0, %v808
    %v810 = vrot.slane %v805, %v809
    %v812 = vadd.f32 %v803, %v810
    %v813 = vadd.f32 %v804, %v810
    %v814 = vld [vmem:[%s9] sm:$0x1]
    %v815 = vld [vmem:[%s10] sm:$0x1]
    %v816 = vsel %vm185, %v812, 0.0
    %817 = vadd.xlane.f32.xlu0 %v816
    %v818 = vpop.xlane.xlu0 %817
    %v819 = vsel %vm185, %v813, 0.0
    %820 = vadd.xlane.f32.xlu0 %v819
    %v821 = vpop.xlane.xlu0 %820
    %v822 = vmul.f32 %v818, %v192
    %v823 = vmul.f32 %v821, %v192
    %v824 = vsub.f32 %v812, %v822
    %v825 = vsub.f32 %v813, %v823
    %v826 = vmul.f32 %v824, %v824
    %v827 = vmul.f32 %v825, %v825
    %v828 = vsel %vm185, %v826, 0.0
    %829 = vadd.xlane.f32.xlu0 %v828
    %v830 = vpop.xlane.xlu0 %829
    %v831 = vsel %vm185, %v827, 0.0
    %832 = vadd.xlane.f32.xlu0 %v831
    %v833 = vpop.xlane.xlu0 %832
    %v834 = vmul.f32 %v830, %v192
    %v835 = vmul.f32 %v833, %v192
    %v836 = vadd.f32 %v834, 1e-05
    %v837 = vadd.f32 %v835, 1e-05
    %v838 = vrsqrt.pop %v836
    %v839 = vrsqrt.pop %v837
    %v840 = vmul.f32 %v824, %v838
    %v841 = vmul.f32 %v825, %v839
    %v843 = vlaneseq
    %v844 = vshrl.u32 %v843, 7
    %v845 = vsub.s32 0, %v844
    %v846 = vrot.slane %v814, %v845
    %v848 = vmul.f32 %v840, %v846
    %v849 = vmul.f32 %v841, %v846
    %v851 = vlaneseq
    %v852 = vshrl.u32 %v851, 7
    %v853 = vsub.s32 0, %v852
    %v854 = vrot.slane %v815, %v853
    %v856 = vadd.f32 %v848, %v854
    %v857 = vadd.f32 %v849, %v854
    %v858 = vld [vmem:[%s11] sm:$0xff]
    %v859 = vld [vmem:[%s11 + $0x8] sm:$0xff]
    %v860 = vld [vmem:[%s11 + $0x10] sm:$0xff]
    %v861 = vld [vmem:[%s11 + $0x18] sm:$0xff]
    %v862 = vld [vmem:[%s12] sm:$0x1]
    %v864 = vlaneseq
    %v865 = vshrl.u32 %v864, 7
    %v866 = vsub.s32 0, %v865
    %v867 = vrot.slane %v862, %v866
    %v870 = vsel %vm185, %v856, 0
    %v873 = vsel %vm185, %v857, 0
    %875 = vmatprep.subr.mxu0 0.0
    %876 = vmatpush1.msra.mxu0 %v858
    %877 = vmatprep.subr.mxu0 0.0
    %878 = vmatpush1.msra.mxu0 %v859
    %879 = vmatprep.subr.mxu0 0.0
    %880 = vmatpush1.msra.mxu0 %v860
    %881 = vmatprep.subr.mxu0 0.0
    %882 = vmatpush1.msra.mxu0 %v861
    %883 = vmatprep.subr.mxu0 0.0
    %884 = vmatpush1.msra.mxu0 0.0
    %885 = vmatprep.subr.mxu0 0.0
    %886 = vmatpush1.msra.mxu0 0.0
    %887 = vmatprep.subr.mxu0 0.0
    %888 = vmatpush1.msra.mxu0 0.0
    %889 = vmatprep.subr.mxu0 0.0
    %890 = vmatpush1.msra.mxu0 0.0
    %891 = vmatprep.subr.mxu0 0.0
    %892 = vmatpush1.msra.mxu0 0.0
    %893 = vmatprep.subr.mxu0 0.0
    %894 = vmatpush1.msra.mxu0 0.0
    %895 = vmatprep.subr.mxu0 0.0
    %896 = vmatpush1.msra.mxu0 0.0
    %897 = vmatprep.subr.mxu0 0.0
    %898 = vmatpush1.msra.mxu0 0.0
    %899 = vmatprep.subr.mxu0 0.0
    %900 = vmatpush1.msra.mxu0 0.0
    %901 = vmatprep.subr.mxu0 0.0
    %902 = vmatpush1.msra.mxu0 0.0
    %903 = vmatprep.subr.mxu0 0.0
    %904 = vmatpush1.msra.mxu0 0.0
    %905 = vmatprep.subr.mxu0 0.0
    %906 = vmatpush1.msra.mxu0 0.0
    %907 = vmatprep.subr.mxu0 0.0
    %908 = vmatpush1.msra.mxu0 0.0
    %909 = vmatprep.subr.mxu0 0.0
    %910 = vmatpush1.msra.mxu0 0.0
    %911 = vmatprep.subr.mxu0 0.0
    %912 = vmatpush1.msra.mxu0 0.0
    %913 = vmatprep.subr.mxu0 0.0
    %914 = vmatpush1.msra.mxu0 0.0
    %915 = vmatprep.subr.mxu0 0.0
    %916 = vmatpush1.msra.mxu0 0.0
    %917 = vmatprep.subr.mxu0 0.0
    %918 = vmatpush1.msra.mxu0 0.0
    %919 = vmatprep.subr.mxu0 0.0
    %920 = vmatpush1.msra.mxu0 0.0
    %921 = vmatprep.subr.mxu0 0.0
    %922 = vmatpush1.msra.mxu0 0.0
    %923 = vmatprep.subr.mxu0 0.0
    %924 = vmatpush1.msra.mxu0 0.0
    %925 = vmatprep.subr.mxu0 0.0
    %926 = vmatpush1.msra.mxu0 0.0
    %927 = vmatprep.subr.mxu0 0.0
    %928 = vmatpush1.msra.mxu0 0.0
    %929 = vmatprep.subr.mxu0 0.0
    %930 = vmatpush1.msra.mxu0 0.0
    %931 = vmatprep.subr.mxu0 0.0
    %932 = vmatpush1.msra.mxu0 0.0
    %933 = vmatprep.subr.mxu0 0.0
    %934 = vmatpush1.msra.mxu0 0.0
    %935 = vmatprep.subr.mxu0 0.0
    %936 = vmatpush1.msra.mxu0 0.0
    %937 = vmatprep.subr.mxu0 0.0
    %938 = vmatpush1.msra.mxu0 0.0
    %939 = vmatprep.mubr.f32.mxu0 0.0
    %940 = vmatmul.mubr.f32.gmra.mrb[0].mxu0 %v870
    %v941 = vpop.f32.mrb[0].mxu0
    %v942 = vadd.f32 %v867, %v941
    %v943 = vpop.f32.mrb[0].mxu0
    %944 = vmatprep.mubr.f32.mxu0 0.0
    %945 = vmatmul.mubr.f32.gmra.mrb[0].mxu0 %v873
    %v946 = vpop.f32.mrb[0].mxu0
    %v947 = vadd.f32 %v867, %v946
    %v948 = vpop.f32.mrb[0].mxu0
    %949 = vdwg.mxu0
    %v950 = vmul.f32 %v942, 1.702
    %v951 = vmul.f32 %v947, 1.702
    %v952 = vxor.u32 %v950, 2147483648
    %v953 = vxor.u32 %v951, 2147483648
    %v954 = vmul.f32 %v952, 1.442695
    %v955 = vpow.pop %v954
    %v956 = vmul.f32 %v953, 1.442695
    %v957 = vpow.pop %v956
    %v958 = vadd.f32 %v955, 1.0
    %v959 = vadd.f32 %v957, 1.0
    %v960 = vrcp.pop %v958
    %v961 = vmul.f32 1.0, %v960
    %v962 = vrcp.pop %v959
    %v963 = vmul.f32 1.0, %v962
    %v964 = vmul.f32 %v942, %v961
    %v965 = vmul.f32 %v947, %v963
    %v966 = vld [vmem:[%s13] sm:$0xff]
    %v967 = vld [vmem:[%s13 + $0x8] sm:$0xff]
    %v968 = vld [vmem:[%s13 + $0x10] sm:$0xff]
    %v969 = vld [vmem:[%s13 + $0x18] sm:$0xff]
    %v970 = vld [vmem:[%s13 + $0x20] sm:$0xff]
    %v971 = vld [vmem:[%s13 + $0x28] sm:$0xff]
    %v972 = vld [vmem:[%s13 + $0x30] sm:$0xff]
    %v973 = vld [vmem:[%s13 + $0x38] sm:$0xff]
    %v975 = vsel %vm81, %v964, 0
    %v978 = vsel %vm81, %v965, 0
    %980 = vmatprep.subr.mxu0 0.0
    %981 = vmatpush1.msra.mxu0 %v966
    %982 = vmatprep.subr.mxu0 0.0
    %983 = vmatpush1.msra.mxu0 %v967
    %984 = vmatprep.subr.mxu0 0.0
    %985 = vmatpush1.msra.mxu0 %v968
    %986 = vmatprep.subr.mxu0 0.0
    %987 = vmatpush1.msra.mxu0 %v969
    %988 = vmatprep.subr.mxu0 0.0
    %989 = vmatpush1.msra.mxu0 %v970
    %990 = vmatprep.subr.mxu0 0.0
    %991 = vmatpush1.msra.mxu0 %v971
    %992 = vmatprep.subr.mxu0 0.0
    %993 = vmatpush1.msra.mxu0 %v972
    %994 = vmatprep.subr.mxu0 0.0
    %995 = vmatpush1.msra.mxu0 %v973
    %996 = vmatprep.subr.mxu0 0.0
    %997 = vmatpush1.msra.mxu0 0.0
    %998 = vmatprep.subr.mxu0 0.0
    %999 = vmatpush1.msra.mxu0 0.0
    %1000 = vmatprep.subr.mxu0 0.0
    %1001 = vmatpush1.msra.mxu0 0.0
    %1002 = vmatprep.subr.mxu0 0.0
    %1003 = vmatpush1.msra.mxu0 0.0
    %1004 = vmatprep.subr.mxu0 0.0
    %1005 = vmatpush1.msra.mxu0 0.0
    %1006 = vmatprep.subr.mxu0 0.0
    %1007 = vmatpush1.msra.mxu0 0.0
    %1008 = vmatprep.subr.mxu0 0.0
    %1009 = vmatpush1.msra.mxu0 0.0
    %1010 = vmatprep.subr.mxu0 0.0
    %1011 = vmatpush1.msra.mxu0 0.0
    %1012 = vmatprep.subr.mxu0 0.0
    %1013 = vmatpush1.msra.mxu0 0.0
    %1014 = vmatprep.subr.mxu0 0.0
    %1015 = vmatpush1.msra.mxu0 0.0
    %1016 = vmatprep.subr.mxu0 0.0
    %1017 = vmatpush1.msra.mxu0 0.0
    %1018 = vmatprep.subr.mxu0 0.0
    %1019 = vmatpush1.msra.mxu0 0.0
    %1020 = vmatprep.subr.mxu0 0.0
    %1021 = vmatpush1.msra.mxu0 0.0
    %1022 = vmatprep.subr.mxu0 0.0
    %1023 = vmatpush1.msra.mxu0 0.0
    %1024 = vmatprep.subr.mxu0 0.0
    %1025 = vmatpush1.msra.mxu0 0.0
    %1026 = vmatprep.subr.mxu0 0.0
    %1027 = vmatpush1.msra.mxu0 0.0
    %1028 = vmatprep.subr.mxu0 0.0
    %1029 = vmatpush1.msra.mxu0 0.0
    %1030 = vmatprep.subr.mxu0 0.0
    %1031 = vmatpush1.msra.mxu0 0.0
    %1032 = vmatprep.subr.mxu0 0.0
    %1033 = vmatpush1.msra.mxu0 0.0
    %1034 = vmatprep.subr.mxu0 0.0
    %1035 = vmatpush1.msra.mxu0 0.0
    %1036 = vmatprep.subr.mxu0 0.0
    %1037 = vmatpush1.msra.mxu0 0.0
    %1038 = vmatprep.subr.mxu0 0.0
    %1039 = vmatpush1.msra.mxu0 0.0
    %1040 = vmatprep.subr.mxu0 0.0
    %1041 = vmatpush1.msra.mxu0 0.0
    %1042 = vmatprep.subr.mxu0 0.0
    %1043 = vmatpush1.msra.mxu0 0.0
    %1044 = vmatprep.mubr.f32.mxu0 0.0
    %1045 = vmatmul.mubr.f32.gmra.mrb[0].mxu0 %v975
    %v1046 = vpop.f32.mrb[0].mxu0
    %v1047 = vadd.f32 0.0, %v1046
    %v1048 = vpop.f32.mrb[0].mxu0
    %1049 = vmatprep.mubr.f32.mxu0 0.0
    %1050 = vmatmul.mubr.f32.gmra.mrb[0].mxu0 %v978
    %v1051 = vpop.f32.mrb[0].mxu0
    %v1052 = vadd.f32 0.0, %v1051
    %v1053 = vpop.f32.mrb[0].mxu0
    %1054 = vdwg.mxu0
    %v1055 = vadd.f32 %v812, %v1047
    %v1056 = vadd.f32 %v813, %v1052
    %v1057 = vld [vmem:[%s14] sm:$0x1]
    %v1059 = vlaneseq
    %v1060 = vshrl.u32 %v1059, 7
    %v1061 = vsub.s32 0, %v1060
    %v1062 = vrot.slane %v1057, %v1061
    %v1064 = vadd.f32 %v1055, %v1062
    %v1065 = vadd.f32 %v1056, %v1062
    %s1066 = scalar_lea.vmem %s3, 1
    %v1067 = vld [vmem:[%s1066] sm:$0x1]
    %s1068 = scalar_lea.vmem %s4, 1
    %v1069 = vld [vmem:[%s1068] sm:$0x1]
    %v1070 = vsel %vm185, %v1064, 0.0
    %1071 = vadd.xlane.f32.xlu0 %v1070
    %v1072 = vpop.xlane.xlu0 %1071
    %v1073 = vsel %vm185, %v1065, 0.0
    %1074 = vadd.xlane.f32.xlu0 %v1073
    %v1075 = vpop.xlane.xlu0 %1074
    %v1076 = vmul.f32 %v1072, %v192
    %v1077 = vmul.f32 %v1075, %v192
    %v1078 = vsub.f32 %v1064, %v1076
    %v1079 = vsub.f32 %v1065, %v1077
    %v1080 = vmul.f32 %v1078, %v1078
    %v1081 = vmul.f32 %v1079, %v1079
    %v1082 = vsel %vm185, %v1080, 0.0
    %1083 = vadd.xlane.f32.xlu0 %v1082
    %v1084 = vpop.xlane.xlu0 %1083
    %v1085 = vsel %vm185, %v1081, 0.0
    %1086 = vadd.xlane.f32.xlu0 %v1085
    %v1087 = vpop.xlane.xlu0 %1086
    %v1088 = vmul.f32 %v1084, %v192
    %v1089 = vmul.f32 %v1087, %v192
    %v1090 = vadd.f32 %v1088, 1e-05
    %v1091 = vadd.f32 %v1089, 1e-05
    %v1092 = vrsqrt.pop %v1090
    %v1093 = vrsqrt.pop %v1091
    %v1094 = vmul.f32 %v1078, %v1092
    %v1095 = vmul.f32 %v1079, %v1093
    %v1097 = vlaneseq
    %v1098 = vshrl.u32 %v1097, 7
    %v1099 = vsub.s32 0, %v1098
    %v1100 = vrot.slane %v1067, %v1099
    %v1102 = vmul.f32 %v1094, %v1100
    %v1103 = vmul.f32 %v1095, %v1100
    %v1105 = vlaneseq
    %v1106 = vshrl.u32 %v1105, 7
    %v1107 = vsub.s32 0, %v1106
    %v1108 = vrot.slane %v1069, %v1107
    %v1110 = vadd.f32 %v1102, %v1108
    %v1111 = vadd.f32 %v1103, %v1108
    %s1112 = scalar_lea.vmem %s5, 32
    %v1113 = vld [vmem:[%s1112] sm:$0xff]
    %v1114 = vld [vmem:[%s1112 + $0x8] sm:$0xff]
    %v1115 = vld [vmem:[%s1112 + $0x10] sm:$0xff]
    %v1116 = vld [vmem:[%s1112 + $0x18] sm:$0xff]
    %s1117 = scalar_lea.vmem %s6, 1
    %v1118 = vld [vmem:[%s1117] sm:$0x1]
    %v1120 = vlaneseq
    %v1121 = vshrl.u32 %v1120, 7
    %v1122 = vsub.s32 0, %v1121
    %v1123 = vrot.slane %v1118, %v1122
    %v1126 = vsel %vm185, %v1110, 0
    %v1129 = vsel %vm185, %v1111, 0
    %1131 = vmatprep.subr.mxu0 0.0
    %1132 = vmatpush1.msra.mxu0 %v1113
    %1133 = vmatprep.subr.mxu0 0.0
    %1134 = vmatpush1.msra.mxu0 %v1114
    %1135 = vmatprep.subr.mxu0 0.0
    %1136 = vmatpush1.msra.mxu0 %v1115
    %1137 = vmatprep.subr.mxu0 0.0
    %1138 = vmatpush1.msra.mxu0 %v1116
    %1139 = vmatprep.subr.mxu0 0.0
    %1140 = vmatpush1.msra.mxu0 0.0
    %1141 = vmatprep.subr.mxu0 0.0
    %1142 = vmatpush1.msra.mxu0 0.0
    %1143 = vmatprep.subr.mxu0 0.0
    %1144 = vmatpush1.msra.mxu0 0.0
    %1145 = vmatprep.subr.mxu0 0.0
    %1146 = vmatpush1.msra.mxu0 0.0
    %1147 = vmatprep.subr.mxu0 0.0
    %1148 = vmatpush1.msra.mxu0 0.0
    %1149 = vmatprep.subr.mxu0 0.0
    %1150 = vmatpush1.msra.mxu0 0.0
    %1151 = vmatprep.subr.mxu0 0.0
    %1152 = vmatpush1.msra.mxu0 0.0
    %1153 = vmatprep.subr.mxu0 0.0
    %1154 = vmatpush1.msra.mxu0 0.0
    %1155 = vmatprep.subr.mxu0 0.0
    %1156 = vmatpush1.msra.mxu0 0.0
    %1157 = vmatprep.subr.mxu0 0.0
    %1158 = vmatpush1.msra.mxu0 0.0
    %1159 = vmatprep.subr.mxu0 0.0
    %1160 = vmatpush1.msra.mxu0 0.0
    %1161 = vmatprep.subr.mxu0 0.0
    %1162 = vmatpush1.msra.mxu0 0.0
    %1163 = vmatprep.subr.mxu0 0.0
    %1164 = vmatpush1.msra.mxu0 0.0
    %1165 = vmatprep.subr.mxu0 0.0
    %1166 = vmatpush1.msra.mxu0 0.0
    %1167 = vmatprep.subr.mxu0 0.0
    %1168 = vmatpush1.msra.mxu0 0.0
    %1169 = vmatprep.subr.mxu0 0.0
    %1170 = vmatpush1.msra.mxu0 0.0
    %1171 = vmatprep.subr.mxu0 0.0
    %1172 = vmatpush1.msra.mxu0 0.0
    %1173 = vmatprep.subr.mxu0 0.0
    %1174 = vmatpush1.msra.mxu0 0.0
    %1175 = vmatprep.subr.mxu0 0.0
    %1176 = vmatpush1.msra.mxu0 0.0
    %1177 = vmatprep.subr.mxu0 0.0
    %1178 = vmatpush1.msra.mxu0 0.0
    %1179 = vmatprep.subr.mxu0 0.0
    %1180 = vmatpush1.msra.mxu0 0.0
    %1181 = vmatprep.subr.mxu0 0.0
    %1182 = vmatpush1.msra.mxu0 0.0
    %1183 = vmatprep.subr.mxu0 0.0
    %1184 = vmatpush1.msra.mxu0 0.0
    %1185 = vmatprep.subr.mxu0 0.0
    %1186 = vmatpush1.msra.mxu0 0.0
    %1187 = vmatprep.subr.mxu0 0.0
    %1188 = vmatpush1.msra.mxu0 0.0
    %1189 = vmatprep.subr.mxu0 0.0
    %1190 = vmatpush1.msra.mxu0 0.0
    %1191 = vmatprep.subr.mxu0 0.0
    %1192 = vmatpush1.msra.mxu0 0.0
    %1193 = vmatprep.subr.mxu0 0.0
    %1194 = vmatpush1.msra.mxu0 0.0
    %1195 = vmatprep.mubr.f32.mxu0 0.0
    %1196 = vmatmul.mubr.f32.gmra.mrb[0].mxu0 %v1126
    %v1197 = vpop.f32.mrb[0].mxu0
    %v1198 = vadd.f32 %v1123, %v1197
    %v1199 = vpop.f32.mrb[0].mxu0
    %1200 = vmatprep.mubr.f32.mxu0 0.0
    %1201 = vmatmul.mubr.f32.gmra.mrb[0].mxu0 %v1129
    %v1202 = vpop.f32.mrb[0].mxu0
    %v1203 = vadd.f32 %v1123, %v1202
    %v1204 = vpop.f32.mrb[0].mxu0
    %1205 = vdwg.mxu0
    %v1206 = vmul.f32 %v1198, 0.25
    %v1207 = vmul.f32 %v1203, 0.25
    %1210 = vrot.lane.b32.xlu0 %v1198, 96
    %v1211 = vpop.permute.xlu0 %1210
    %1212 = vrot.lane.b32.xlu0 %v1203, 96
    %v1213 = vpop.permute.xlu0 %1212
    %v1215 = vsel %vm329, %v1206, 0
    %v1218 = vsel %vm329, %v1207, 0
    %v1220 = vsel %vm329, %v1211, 0
    %v1222 = vsel %vm329, %v1213, 0
    %1224 = vmatprep.subr.mxu0 0.0
    %1225 = vmatpush1.xpose.msra.mxu0 %v1220
    %1226 = vmatprep.subr.mxu0 0.0
    %1227 = vmatpush1.xpose.msra.mxu0 %v1222
    %1228 = vmatprep.subr.mxu0 0.0
    %1229 = vmatpush1.xpose.msra.mxu0 0.0
    %1230 = vmatprep.subr.mxu0 0.0
    %1231 = vmatpush1.xpose.msra.mxu0 0.0
    %1232 = vmatprep.subr.mxu0 0.0
    %1233 = vmatpush1.xpose.msra.mxu0 0.0
    %1234 = vmatprep.subr.mxu0 0.0
    %1235 = vmatpush1.xpose.msra.mxu0 0.0
    %1236 = vmatprep.subr.mxu0 0.0
    %1237 = vmatpush1.xpose.msra.mxu0 0.0
    %1238 = vmatprep.subr.mxu0 0.0
    %1239 = vmatpush1.xpose.msra.mxu0 0.0
    %1240 = vmatprep.subr.mxu0 0.0
    %1241 = vmatpush1.xpose.msra.mxu0 0.0
    %1242 = vmatprep.subr.mxu0 0.0
    %1243 = vmatpush1.xpose.msra.mxu0 0.0
    %1244 = vmatprep.subr.mxu0 0.0
    %1245 = vmatpush1.xpose.msra.mxu0 0.0
    %1246 = vmatprep.subr.mxu0 0.0
    %1247 = vmatpush1.xpose.msra.mxu0 0.0
    %1248 = vmatprep.subr.mxu0 0.0
    %1249 = vmatpush1.xpose.msra.mxu0 0.0
    %1250 = vmatprep.subr.mxu0 0.0
    %1251 = vmatpush1.xpose.msra.mxu0 0.0
    %1252 = vmatprep.subr.mxu0 0.0
    %1253 = vmatpush1.xpose.msra.mxu0 0.0
    %1254 = vmatprep.subr.mxu0 0.0
    %1255 = vmatpush1.xpose.msra.mxu0 0.0
    %1256 = vmatprep.subr.mxu0 0.0
    %1257 = vmatpush1.xpose.msra.mxu0 0.0
    %1258 = vmatprep.subr.mxu0 0.0
    %1259 = vmatpush1.xpose.msra.mxu0 0.0
    %1260 = vmatprep.subr.mxu0 0.0
    %1261 = vmatpush1.xpose.msra.mxu0 0.0
    %1262 = vmatprep.subr.mxu0 0.0
    %1263 = vmatpush1.xpose.msra.mxu0 0.0
    %1264 = vmatprep.subr.mxu0 0.0
    %1265 = vmatpush1.xpose.msra.mxu0 0.0
    %1266 = vmatprep.subr.mxu0 0.0
    %1267 = vmatpush1.xpose.msra.mxu0 0.0
    %1268 = vmatprep.subr.mxu0 0.0
    %1269 = vmatpush1.xpose.msra.mxu0 0.0
    %1270 = vmatprep.subr.mxu0 0.0
    %1271 = vmatpush1.xpose.msra.mxu0 0.0
    %1272 = vmatprep.subr.mxu0 0.0
    %1273 = vmatpush1.xpose.msra.mxu0 0.0
    %1274 = vmatprep.subr.mxu0 0.0
    %1275 = vmatpush1.xpose.msra.mxu0 0.0
    %1276 = vmatprep.subr.mxu0 0.0
    %1277 = vmatpush1.xpose.msra.mxu0 0.0
    %1278 = vmatprep.subr.mxu0 0.0
    %1279 = vmatpush1.xpose.msra.mxu0 0.0
    %1280 = vmatprep.subr.mxu0 0.0
    %1281 = vmatpush1.xpose.msra.mxu0 0.0
    %1282 = vmatprep.subr.mxu0 0.0
    %1283 = vmatpush1.xpose.msra.mxu0 0.0
    %1284 = vmatprep.subr.mxu0 0.0
    %1285 = vmatpush1.xpose.msra.mxu0 0.0
    %1286 = vmatprep.subr.mxu0 0.0
    %1287 = vmatpush1.xpose.msra.mxu0 0.0
    %1288 = vmatprep.mubr.f32.mxu0 0.0
    %1289 = vmatmul.mubr.f32.gmra.mrb[0].mxu0 %v1215
    %v1290 = vpop.f32.mrb[0].mxu0
    %v1291 = vadd.f32 %v181, %v1290
    %v1292 = vpop.f32.mrb[0].mxu0
    %1293 = vmatprep.mubr.f32.mxu0 0.0
    %1294 = vmatmul.mubr.f32.gmra.mrb[0].mxu0 %v1218
    %v1295 = vpop.f32.mrb[0].mxu0
    %v1296 = vadd.f32 %v182, %v1295
    %v1297 = vpop.f32.mrb[0].mxu0
    %1298 = vdwg.mxu0
    %v1299 = vmul.f32 %v1291, 1.442695
    %v1300 = vpow.pop %v1299
    %v1301 = vmul.f32 %v1296, 1.442695
    %v1302 = vpow.pop %v1301
    %v1303 = vsel %vm329, %v1300, 0.0
    %1304 = vadd.xlane.f32.xlu0 %v1303
    %v1305 = vpop.xlane.xlu0 %1304
    %v1306 = vsel %vm329, %v1302, 0.0
    %1307 = vadd.xlane.f32.xlu0 %v1306
    %v1308 = vpop.xlane.xlu0 %1307
    %v1309 = vrcp.pop %v1305
    %v1310 = vrcp.pop %v1308
    %v1311 = vmul.f32 %v1300, %v1309
    %v1312 = vmul.f32 %v1302, %v1310
    %1313 = vrot.lane.b32.xlu0 %v1198, 64
    %v1314 = vpop.permute.xlu0 %1313
    %1315 = vrot.lane.b32.xlu0 %v1203, 64
    %v1316 = vpop.permute.xlu0 %1315
    %v1320 = vsel %vm329, %v1311, 0
    %v1323 = vsel %vm329, %v1312, 0
    %1325 = vmatprep.subr.mxu0 0.0
    %1326 = vmatpush1.msra.mxu0 %v1314
    %1327 = vmatprep.subr.mxu0 0.0
    %1328 = vmatpush1.msra.mxu0 %v1316
    %1329 = vmatprep.subr.mxu0 0.0
    %1330 = vmatpush1.msra.mxu0 0.0
    %1331 = vmatprep.subr.mxu0 0.0
    %1332 = vmatpush1.msra.mxu0 0.0
    %1333 = vmatprep.subr.mxu0 0.0
    %1334 = vmatpush1.msra.mxu0 0.0
    %1335 = vmatprep.subr.mxu0 0.0
    %1336 = vmatpush1.msra.mxu0 0.0
    %1337 = vmatprep.subr.mxu0 0.0
    %1338 = vmatpush1.msra.mxu0 0.0
    %1339 = vmatprep.subr.mxu0 0.0
    %1340 = vmatpush1.msra.mxu0 0.0
    %1341 = vmatprep.subr.mxu0 0.0
    %1342 = vmatpush1.msra.mxu0 0.0
    %1343 = vmatprep.subr.mxu0 0.0
    %1344 = vmatpush1.msra.mxu0 0.0
    %1345 = vmatprep.subr.mxu0 0.0
    %1346 = vmatpush1.msra.mxu0 0.0
    %1347 = vmatprep.subr.mxu0 0.0
    %1348 = vmatpush1.msra.mxu0 0.0
    %1349 = vmatprep.subr.mxu0 0.0
    %1350 = vmatpush1.msra.mxu0 0.0
    %1351 = vmatprep.subr.mxu0 0.0
    %1352 = vmatpush1.msra.mxu0 0.0
    %1353 = vmatprep.subr.mxu0 0.0
    %1354 = vmatpush1.msra.mxu0 0.0
    %1355 = vmatprep.subr.mxu0 0.0
    %1356 = vmatpush1.msra.mxu0 0.0
    %1357 = vmatprep.subr.mxu0 0.0
    %1358 = vmatpush1.msra.mxu0 0.0
    %1359 = vmatprep.subr.mxu0 0.0
    %1360 = vmatpush1.msra.mxu0 0.0
    %1361 = vmatprep.subr.mxu0 0.0
    %1362 = vmatpush1.msra.mxu0 0.0
    %1363 = vmatprep.subr.mxu0 0.0
    %1364 = vmatpush1.msra.mxu0 0.0
    %1365 = vmatprep.subr.mxu0 0.0
    %1366 = vmatpush1.msra.mxu0 0.0
    %1367 = vmatprep.subr.mxu0 0.0
    %1368 = vmatpush1.msra.mxu0 0.0
    %1369 = vmatprep.subr.mxu0 0.0
    %1370 = vmatpush1.msra.mxu0 0.0
    %1371 = vmatprep.subr.mxu0 0.0
    %1372 = vmatpush1.msra.mxu0 0.0
    %1373 = vmatprep.subr.mxu0 0.0
    %1374 = vmatpush1.msra.mxu0 0.0
    %1375 = vmatprep.subr.mxu0 0.0
    %1376 = vmatpush1.msra.mxu0 0.0
    %1377 = vmatprep.subr.mxu0 0.0
    %1378 = vmatpush1.msra.mxu0 0.0
    %1379 = vmatprep.subr.mxu0 0.0
    %1380 = vmatpush1.msra.mxu0 0.0
    %1381 = vmatprep.subr.mxu0 0.0
    %1382 = vmatpush1.msra.mxu0 0.0
    %1383 = vmatprep.subr.mxu0 0.0
    %1384 = vmatpush1.msra.mxu0 0.0
    %1385 = vmatprep.subr.mxu0 0.0
    %1386 = vmatpush1.msra.mxu0 0.0
    %1387 = vmatprep.subr.mxu0 0.0
    %1388 = vmatpush1.msra.mxu0 0.0
    %1389 = vmatprep.mubr.f32.mxu0 0.0
    %1390 = vmatmul.mubr.f32.gmra.mrb[0].mxu0 %v1320
    %v1391 = vpop.f32.mrb[0].mxu0
    %v1392 = vadd.f32 0.0, %v1391
    %v1393 = vpop.f32.mrb[0].mxu0
    %1394 = vmatprep.mubr.f32.mxu0 0.0
    %1395 = vmatmul.mubr.f32.gmra.mrb[0].mxu0 %v1323
    %v1396 = vpop.f32.mrb[0].mxu0
    %v1397 = vadd.f32 0.0, %v1396
    %v1398 = vpop.f32.mrb[0].mxu0
    %1399 = vdwg.mxu0
    %1400 = vrot.lane.b32.xlu0 %v1206, 112
    %v1401 = vpop.permute.xlu0 %1400
    %1402 = vrot.lane.b32.xlu0 %v1207, 112
    %v1403 = vpop.permute.xlu0 %1402
    %1404 = vrot.lane.b32.xlu0 %v1198, 80
    %v1405 = vpop.permute.xlu0 %1404
    %1406 = vrot.lane.b32.xlu0 %v1203, 80
    %v1407 = vpop.permute.xlu0 %1406
    %v1408 = vsel %vm329, %v1401, 0
    %v1410 = vsel %vm329, %v1403, 0
    %v1412 = vsel %vm329, %v1405, 0
    %v1414 = vsel %vm329, %v1407, 0
    %1416 = vmatprep.subr.mxu0 0.0
    %1417 = vmatpush1.xpose.msra.mxu0 %v1412
    %1418 = vmatprep.subr.mxu0 0.0
    %1419 = vmatpush1.xpose.msra.mxu0 %v1414
    %1420 = vmatprep.subr.mxu0 0.0
    %1421 = vmatpush1.xpose.msra.mxu0 0.0
    %1422 = vmatprep.subr.mxu0 0.0
    %1423 = vmatpush1.xpose.msra.mxu0 0.0
    %1424 = vmatprep.subr.mxu0 0.0
    %1425 = vmatpush1.xpose.msra.mxu0 0.0
    %1426 = vmatprep.subr.mxu0 0.0
    %1427 = vmatpush1.xpose.msra.mxu0 0.0
    %1428 = vmatprep.subr.mxu0 0.0
    %1429 = vmatpush1.xpose.msra.mxu0 0.0
    %1430 = vmatprep.subr.mxu0 0.0
    %1431 = vmatpush1.xpose.msra.mxu0 0.0
    %1432 = vmatprep.subr.mxu0 0.0
    %1433 = vmatpush1.xpose.msra.mxu0 0.0
    %1434 = vmatprep.subr.mxu0 0.0
    %1435 = vmatpush1.xpose.msra.mxu0 0.0
    %1436 = vmatprep.subr.mxu0 0.0
    %1437 = vmatpush1.xpose.msra.mxu0 0.0
    %1438 = vmatprep.subr.mxu0 0.0
    %1439 = vmatpush1.xpose.msra.mxu0 0.0
    %1440 = vmatprep.subr.mxu0 0.0
    %1441 = vmatpush1.xpose.msra.mxu0 0.0
    %1442 = vmatprep.subr.mxu0 0.0
    %1443 = vmatpush1.xpose.msra.mxu0 0.0
    %1444 = vmatprep.subr.mxu0 0.0
    %1445 = vmatpush1.xpose.msra.mxu0 0.0
    %1446 = vmatprep.subr.mxu0 0.0
    %1447 = vmatpush1.xpose.msra.mxu0 0.0
    %1448 = vmatprep.subr.mxu0 0.0
    %1449 = vmatpush1.xpose.msra.mxu0 0.0
    %1450 = vmatprep.subr.mxu0 0.0
    %1451 = vmatpush1.xpose.msra.mxu0 0.0
    %1452 = vmatprep.subr.mxu0 0.0
    %1453 = vmatpush1.xpose.msra.mxu0 0.0
    %1454 = vmatprep.subr.mxu0 0.0
    %1455 = vmatpush1.xpose.msra.mxu0 0.0
    %1456 = vmatprep.subr.mxu0 0.0
    %1457 = vmatpush1.xpose.msra.mxu0 0.0
    %1458 = vmatprep.subr.mxu0 0.0
    %1459 = vmatpush1.xpose.msra.mxu0 0.0
    %1460 = vmatprep.subr.mxu0 0.0
    %1461 = vmatpush1.xpose.msra.mxu0 0.0
    %1462 = vmatprep.subr.mxu0 0.0
    %1463 = vmatpush1.xpose.msra.mxu0 0.0
    %1464 = vmatprep.subr.mxu0 0.0
    %1465 = vmatpush1.xpose.msra.mxu0 0.0
    %1466 = vmatprep.subr.mxu0 0.0
    %1467 = vmatpush1.xpose.msra.mxu0 0.0
    %1468 = vmatprep.subr.mxu0 0.0
    %1469 = vmatpush1.xpose.msra.mxu0 0.0
    %1470 = vmatprep.subr.mxu0 0.0
    %1471 = vmatpush1.xpose.msra.mxu0 0.0
    %1472 = vmatprep.subr.mxu0 0.0
    %1473 = vmatpush1.xpose.msra.mxu0 0.0
    %1474 = vmatprep.subr.mxu0 0.0
    %1475 = vmatpush1.xpose.msra.mxu0 0.0
    %1476 = vmatprep.subr.mxu0 0.0
    %1477 = vmatpush1.xpose.msra.mxu0 0.0
    %1478 = vmatprep.subr.mxu0 0.0
    %1479 = vmatpush1.xpose.msra.mxu0 0.0
    %1480 = vmatprep.mubr.f32.mxu0 0.0
    %1481 = vmatmul.mubr.f32.gmra.mrb[0].mxu0 %v1408
    %v1482 = vpop.f32.mrb[0].mxu0
    %v1483 = vadd.f32 %v181, %v1482
    %v1484 = vpop.f32.mrb[0].mxu0
    %1485 = vmatprep.mubr.f32.mxu0 0.0
    %1486 = vmatmul.mubr.f32.gmra.mrb[0].mxu0 %v1410
    %v1487 = vpop.f32.mrb[0].mxu0
    %v1488 = vadd.f32 %v182, %v1487
    %v1489 = vpop.f32.mrb[0].mxu0
    %1490 = vdwg.mxu0
    %v1491 = vmul.f32 %v1483, 1.442695
    %v1492 = vpow.pop %v1491
    %v1493 = vmul.f32 %v1488, 1.442695
    %v1494 = vpow.pop %v1493
    %v1495 = vsel %vm329, %v1492, 0.0
    %1496 = vadd.xlane.f32.xlu0 %v1495
    %v1497 = vpop.xlane.xlu0 %1496
    %v1498 = vsel %vm329, %v1494, 0.0
    %1499 = vadd.xlane.f32.xlu0 %v1498
    %v1500 = vpop.xlane.xlu0 %1499
    %v1501 = vrcp.pop %v1497
    %v1502 = vrcp.pop %v1500
    %v1503 = vmul.f32 %v1492, %v1501
    %v1504 = vmul.f32 %v1494, %v1502
    %1505 = vrot.lane.b32.xlu0 %v1198, 48
    %v1506 = vpop.permute.xlu0 %1505
    %1507 = vrot.lane.b32.xlu0 %v1203, 48
    %v1508 = vpop.permute.xlu0 %1507
    %v1512 = vsel %vm329, %v1503, 0
    %v1515 = vsel %vm329, %v1504, 0
    %1517 = vmatprep.subr.mxu0 0.0
    %1518 = vmatpush1.msra.mxu0 %v1506
    %1519 = vmatprep.subr.mxu0 0.0
    %1520 = vmatpush1.msra.mxu0 %v1508
    %1521 = vmatprep.subr.mxu0 0.0
    %1522 = vmatpush1.msra.mxu0 0.0
    %1523 = vmatprep.subr.mxu0 0.0
    %1524 = vmatpush1.msra.mxu0 0.0
    %1525 = vmatprep.subr.mxu0 0.0
    %1526 = vmatpush1.msra.mxu0 0.0
    %1527 = vmatprep.subr.mxu0 0.0
    %1528 = vmatpush1.msra.mxu0 0.0
    %1529 = vmatprep.subr.mxu0 0.0
    %1530 = vmatpush1.msra.mxu0 0.0
    %1531 = vmatprep.subr.mxu0 0.0
    %1532 = vmatpush1.msra.mxu0 0.0
    %1533 = vmatprep.subr.mxu0 0.0
    %1534 = vmatpush1.msra.mxu0 0.0
    %1535 = vmatprep.subr.mxu0 0.0
    %1536 = vmatpush1.msra.mxu0 0.0
    %1537 = vmatprep.subr.mxu0 0.0
    %1538 = vmatpush1.msra.mxu0 0.0
    %1539 = vmatprep.subr.mxu0 0.0
    %1540 = vmatpush1.msra.mxu0 0.0
    %1541 = vmatprep.subr.mxu0 0.0
    %1542 = vmatpush1.msra.mxu0 0.0
    %1543 = vmatprep.subr.mxu0 0.0
    %1544 = vmatpush1.msra.mxu0 0.0
    %1545 = vmatprep.subr.mxu0 0.0
    %1546 = vmatpush1.msra.mxu0 0.0
    %1547 = vmatprep.subr.mxu0 0.0
    %1548 = vmatpush1.msra.mxu0 0.0
    %1549 = vmatprep.subr.mxu0 0.0
    %1550 = vmatpush1.msra.mxu0 0.0
    %1551 = vmatprep.subr.mxu0 0.0
    %1552 = vmatpush1.msra.mxu0 0.0
    %1553 = vmatprep.subr.mxu0 0.0
    %1554 = vmatpush1.msra.mxu0 0.0
    %1555 = vmatprep.subr.mxu0 0.0
    %1556 = vmatpush1.msra.mxu0 0.0
    %1557 = vmatprep.subr.mxu0 0.0
    %1558 = vmatpush1.msra.mxu0 0.0
    %1559 = vmatprep.subr.mxu0 0.0
    %1560 = vmatpush1.msra.mxu0 0.0
    %1561 = vmatprep.subr.mxu0 0.0
    %1562 = vmatpush1.msra.mxu0 0.0
    %1563 = vmatprep.subr.mxu0 0.0
    %1564 = vmatpush1.msra.mxu0 0.0
    %1565 = vmatprep.subr.mxu0 0.0
    %1566 = vmatpush1.msra.mxu0 0.0
    %1567 = vmatprep.subr.mxu0 0.0
    %1568 = vmatpush1.msra.mxu0 0.0
    %1569 = vmatprep.subr.mxu0 0.0
    %1570 = vmatpush1.msra.mxu0 0.0
    %1571 = vmatprep.subr.mxu0 0.0
    %1572 = vmatpush1.msra.mxu0 0.0
    %1573 = vmatprep.subr.mxu0 0.0
    %1574 = vmatpush1.msra.mxu0 0.0
    %1575 = vmatprep.subr.mxu0 0.0
    %1576 = vmatpush1.msra.mxu0 0.0
    %1577 = vmatprep.subr.mxu0 0.0
    %1578 = vmatpush1.msra.mxu0 0.0
    %1579 = vmatprep.subr.mxu0 0.0
    %1580 = vmatpush1.msra.mxu0 0.0
    %1581 = vmatprep.mubr.f32.mxu0 0.0
    %1582 = vmatmul.mubr.f32.gmra.mrb[0].mxu0 %v1512
    %v1583 = vpop.f32.mrb[0].mxu0
    %v1584 = vadd.f32 0.0, %v1583
    %v1585 = vpop.f32.mrb[0].mxu0
    %1586 = vmatprep.mubr.f32.mxu0 0.0
    %1587 = vmatmul.mubr.f32.gmra.mrb[0].mxu0 %v1515
    %v1588 = vpop.f32.mrb[0].mxu0
    %v1589 = vadd.f32 0.0, %v1588
    %v1590 = vpop.f32.mrb[0].mxu0
    %1591 = vdwg.mxu0
    %1594 = vrot.lane.b32.xlu0 %v1584, 16
    %v1595 = vpop.permute.xlu0 %1594
    %1596 = vrot.lane.b32.xlu0 %v1589, 16
    %v1597 = vpop.permute.xlu0 %1596
    %v1600 = vsel %vm329, %v1392, %v1595
    %v1601 = vsel %vm329, %v1397, %v1597
    %s1602 = scalar_lea.vmem %s7, 32
    %v1603 = vld [vmem:[%s1602] sm:$0xff]
    %v1604 = vld [vmem:[%s1602 + $0x8] sm:$0xff]
    %v1605 = vld [vmem:[%s1602 + $0x10] sm:$0xff]
    %v1606 = vld [vmem:[%s1602 + $0x18] sm:$0xff]
    %v1608 = vsel %vm185, %v1600, 0
    %v1611 = vsel %vm185, %v1601, 0
    %1613 = vmatprep.subr.mxu0 0.0
    %1614 = vmatpush1.msra.mxu0 %v1603
    %1615 = vmatprep.subr.mxu0 0.0
    %1616 = vmatpush1.msra.mxu0 %v1604
    %1617 = vmatprep.subr.mxu0 0.0
    %1618 = vmatpush1.msra.mxu0 %v1605
    %1619 = vmatprep.subr.mxu0 0.0
    %1620 = vmatpush1.msra.mxu0 %v1606
    %1621 = vmatprep.subr.mxu0 0.0
    %1622 = vmatpush1.msra.mxu0 0.0
    %1623 = vmatprep.subr.mxu0 0.0
    %1624 = vmatpush1.msra.mxu0 0.0
    %1625 = vmatprep.subr.mxu0 0.0
    %1626 = vmatpush1.msra.mxu0 0.0
    %1627 = vmatprep.subr.mxu0 0.0
    %1628 = vmatpush1.msra.mxu0 0.0
    %1629 = vmatprep.subr.mxu0 0.0
    %1630 = vmatpush1.msra.mxu0 0.0
    %1631 = vmatprep.subr.mxu0 0.0
    %1632 = vmatpush1.msra.mxu0 0.0
    %1633 = vmatprep.subr.mxu0 0.0
    %1634 = vmatpush1.msra.mxu0 0.0
    %1635 = vmatprep.subr.mxu0 0.0
    %1636 = vmatpush1.msra.mxu0 0.0
    %1637 = vmatprep.subr.mxu0 0.0
    %1638 = vmatpush1.msra.mxu0 0.0
    %1639 = vmatprep.subr.mxu0 0.0
    %1640 = vmatpush1.msra.mxu0 0.0
    %1641 = vmatprep.subr.mxu0 0.0
    %1642 = vmatpush1.msra.mxu0 0.0
    %1643 = vmatprep.subr.mxu0 0.0
    %1644 = vmatpush1.msra.mxu0 0.0
    %1645 = vmatprep.subr.mxu0 0.0
    %1646 = vmatpush1.msra.mxu0 0.0
    %1647 = vmatprep.subr.mxu0 0.0
    %1648 = vmatpush1.msra.mxu0 0.0
    %1649 = vmatprep.subr.mxu0 0.0
    %1650 = vmatpush1.msra.mxu0 0.0
    %1651 = vmatprep.subr.mxu0 0.0
    %1652 = vmatpush1.msra.mxu0 0.0
    %1653 = vmatprep.subr.mxu0 0.0
    %1654 = vmatpush1.msra.mxu0 0.0
    %1655 = vmatprep.subr.mxu0 0.0
    %1656 = vmatpush1.msra.mxu0 0.0
    %1657 = vmatprep.subr.mxu0 0.0
    %1658 = vmatpush1.msra.mxu0 0.0
    %1659 = vmatprep.subr.mxu0 0.0
    %1660 = vmatpush1.msra.mxu0 0.0
    %1661 = vmatprep.subr.mxu0 0.0
    %1662 = vmatpush1.msra.mxu0 0.0
    %1663 = vmatprep.subr.mxu0 0.0
    %1664 = vmatpush1.msra.mxu0 0.0
    %1665 = vmatprep.subr.mxu0 0.0
    %1666 = vmatpush1.msra.mxu0 0.0
    %1667 = vmatprep.subr.mxu0 0.0
    %1668 = vmatpush1.msra.mxu0 0.0
    %1669 = vmatprep.subr.mxu0 0.0
    %1670 = vmatpush1.msra.mxu0 0.0
    %1671 = vmatprep.subr.mxu0 0.0
    %1672 = vmatpush1.msra.mxu0 0.0
    %1673 = vmatprep.subr.mxu0 0.0
    %1674 = vmatpush1.msra.mxu0 0.0
    %1675 = vmatprep.subr.mxu0 0.0
    %1676 = vmatpush1.msra.mxu0 0.0
    %1677 = vmatprep.mubr.f32.mxu0 0.0
    %1678 = vmatmul.mubr.f32.gmra.mrb[0].mxu0 %v1608
    %v1679 = vpop.f32.mrb[0].mxu0
    %v1680 = vadd.f32 0.0, %v1679
    %v1681 = vpop.f32.mrb[0].mxu0
    %1682 = vmatprep.mubr.f32.mxu0 0.0
    %1683 = vmatmul.mubr.f32.gmra.mrb[0].mxu0 %v1611
    %v1684 = vpop.f32.mrb[0].mxu0
    %v1685 = vadd.f32 0.0, %v1684
    %v1686 = vpop.f32.mrb[0].mxu0
    %1687 = vdwg.mxu0
    %v1688 = vadd.f32 %v1064, %v1680
    %v1689 = vadd.f32 %v1065, %v1685
    %s1690 = scalar_lea.vmem %s8, 1
    %v1691 = vld [vmem:[%s1690] sm:$0x1]
    %v1693 = vlaneseq
    %v1694 = vshrl.u32 %v1693, 7
    %v1695 = vsub.s32 0, %v1694
    %v1696 = vrot.slane %v1691, %v1695
    %v1698 = vadd.f32 %v1688, %v1696
    %v1699 = vadd.f32 %v1689, %v1696
    %s1700 = scalar_lea.vmem %s9, 1
    %v1701 = vld [vmem:[%s1700] sm:$0x1]
    %s1702 = scalar_lea.vmem %s10, 1
    %v1703 = vld [vmem:[%s1702] sm:$0x1]
    %v1704 = vsel %vm185, %v1698, 0.0
    %1705 = vadd.xlane.f32.xlu0 %v1704
    %v1706 = vpop.xlane.xlu0 %1705
    %v1707 = vsel %vm185, %v1699, 0.0
    %1708 = vadd.xlane.f32.xlu0 %v1707
    %v1709 = vpop.xlane.xlu0 %1708
    %v1710 = vmul.f32 %v1706, %v192
    %v1711 = vmul.f32 %v1709, %v192
    %v1712 = vsub.f32 %v1698, %v1710
    %v1713 = vsub.f32 %v1699, %v1711
    %v1714 = vmul.f32 %v1712, %v1712
    %v1715 = vmul.f32 %v1713, %v1713
    %v1716 = vsel %vm185, %v1714, 0.0
    %1717 = vadd.xlane.f32.xlu0 %v1716
    %v1718 = vpop.xlane.xlu0 %1717
    %v1719 = vsel %vm185, %v1715, 0.0
    %1720 = vadd.xlane.f32.xlu0 %v1719
    %v1721 = vpop.xlane.xlu0 %1720
    %v1722 = vmul.f32 %v1718, %v192
    %v1723 = vmul.f32 %v1721, %v192
    %v1724 = vadd.f32 %v1722, 1e-05
    %v1725 = vadd.f32 %v1723, 1e-05
    %v1726 = vrsqrt.pop %v1724
    %v1727 = vrsqrt.pop %v1725
    %v1728 = vmul.f32 %v1712, %v1726
    %v1729 = vmul.f32 %v1713, %v1727
    %v1731 = vlaneseq
    %v1732 = vshrl.u32 %v1731, 7
    %v1733 = vsub.s32 0, %v1732
    %v1734 = vrot.slane %v1701, %v1733
    %v1736 = vmul.f32 %v1728, %v1734
    %v1737 = vmul.f32 %v1729, %v1734
    %v1739 = vlaneseq
    %v1740 = vshrl.u32 %v1739, 7
    %v1741 = vsub.s32 0, %v1740
    %v1742 = vrot.slane %v1703, %v1741
    %v1744 = vadd.f32 %v1736, %v1742
    %v1745 = vadd.f32 %v1737, %v1742
    %s1746 = scalar_lea.vmem %s11, 32
    %v1747 = vld [vmem:[%s1746] sm:$0xff]
    %v1748 = vld [vmem:[%s1746 + $0x8] sm:$0xff]
    %v1749 = vld [vmem:[%s1746 + $0x10] sm:$0xff]
    %v1750 = vld [vmem:[%s1746 + $0x18] sm:$0xff]
    %s1751 = scalar_lea.vmem %s12, 1
    %v1752 = vld [vmem:[%s1751] sm:$0x1]
    %v1754 = vlaneseq
    %v1755 = vshrl.u32 %v1754, 7
    %v1756 = vsub.s32 0, %v1755
    %v1757 = vrot.slane %v1752, %v1756
    %v1760 = vsel %vm185, %v1744, 0
    %v1763 = vsel %vm185, %v1745, 0
    %1765 = vmatprep.subr.mxu0 0.0
    %1766 = vmatpush1.msra.mxu0 %v1747
    %1767 = vmatprep.subr.mxu0 0.0
    %1768 = vmatpush1.msra.mxu0 %v1748
    %1769 = vmatprep.subr.mxu0 0.0
    %1770 = vmatpush1.msra.mxu0 %v1749
    %1771 = vmatprep.subr.mxu0 0.0
    %1772 = vmatpush1.msra.mxu0 %v1750
    %1773 = vmatprep.subr.mxu0 0.0
    %1774 = vmatpush1.msra.mxu0 0.0
    %1775 = vmatprep.subr.mxu0 0.0
    %1776 = vmatpush1.msra.mxu0 0.0
    %1777 = vmatprep.subr.mxu0 0.0
    %1778 = vmatpush1.msra.mxu0 0.0
    %1779 = vmatprep.subr.mxu0 0.0
    %1780 = vmatpush1.msra.mxu0 0.0
    %1781 = vmatprep.subr.mxu0 0.0
    %1782 = vmatpush1.msra.mxu0 0.0
    %1783 = vmatprep.subr.mxu0 0.0
    %1784 = vmatpush1.msra.mxu0 0.0
    %1785 = vmatprep.subr.mxu0 0.0
    %1786 = vmatpush1.msra.mxu0 0.0
    %1787 = vmatprep.subr.mxu0 0.0
    %1788 = vmatpush1.msra.mxu0 0.0
    %1789 = vmatprep.subr.mxu0 0.0
    %1790 = vmatpush1.msra.mxu0 0.0
    %1791 = vmatprep.subr.mxu0 0.0
    %1792 = vmatpush1.msra.mxu0 0.0
    %1793 = vmatprep.subr.mxu0 0.0
    %1794 = vmatpush1.msra.mxu0 0.0
    %1795 = vmatprep.subr.mxu0 0.0
    %1796 = vmatpush1.msra.mxu0 0.0
    %1797 = vmatprep.subr.mxu0 0.0
    %1798 = vmatpush1.msra.mxu0 0.0
    %1799 = vmatprep.subr.mxu0 0.0
    %1800 = vmatpush1.msra.mxu0 0.0
    %1801 = vmatprep.subr.mxu0 0.0
    %1802 = vmatpush1.msra.mxu0 0.0
    %1803 = vmatprep.subr.mxu0 0.0
    %1804 = vmatpush1.msra.mxu0 0.0
    %1805 = vmatprep.subr.mxu0 0.0
    %1806 = vmatpush1.msra.mxu0 0.0
    %1807 = vmatprep.subr.mxu0 0.0
    %1808 = vmatpush1.msra.mxu0 0.0
    %1809 = vmatprep.subr.mxu0 0.0
    %1810 = vmatpush1.msra.mxu0 0.0
    %1811 = vmatprep.subr.mxu0 0.0
    %1812 = vmatpush1.msra.mxu0 0.0
    %1813 = vmatprep.subr.mxu0 0.0
    %1814 = vmatpush1.msra.mxu0 0.0
    %1815 = vmatprep.subr.mxu0 0.0
    %1816 = vmatpush1.msra.mxu0 0.0
    %1817 = vmatprep.subr.mxu0 0.0
    %1818 = vmatpush1.msra.mxu0 0.0
    %1819 = vmatprep.subr.mxu0 0.0
    %1820 = vmatpush1.msra.mxu0 0.0
    %1821 = vmatprep.subr.mxu0 0.0
    %1822 = vmatpush1.msra.mxu0 0.0
    %1823 = vmatprep.subr.mxu0 0.0
    %1824 = vmatpush1.msra.mxu0 0.0
    %1825 = vmatprep.subr.mxu0 0.0
    %1826 = vmatpush1.msra.mxu0 0.0
    %1827 = vmatprep.subr.mxu0 0.0
    %1828 = vmatpush1.msra.mxu0 0.0
    %1829 = vmatprep.mubr.f32.mxu0 0.0
    %1830 = vmatmul.mubr.f32.gmra.mrb[0].mxu0 %v1760
    %v1831 = vpop.f32.mrb[0].mxu0
    %v1832 = vadd.f32 %v1757, %v1831
    %v1833 = vpop.f32.mrb[0].mxu0
    %1834 = vmatprep.mubr.f32.mxu0 0.0
    %1835 = vmatmul.mubr.f32.gmra.mrb[0].mxu0 %v1763
    %v1836 = vpop.f32.mrb[0].mxu0
    %v1837 = vadd.f32 %v1757, %v1836
    %v1838 = vpop.f32.mrb[0].mxu0
    %1839 = vdwg.mxu0
    %v1840 = vmul.f32 %v1832, 1.702
    %v1841 = vmul.f32 %v1837, 1.702
    %v1842 = vxor.u32 %v1840, 2147483648
    %v1843 = vxor.u32 %v1841, 2147483648
    %v1844 = vmul.f32 %v1842, 1.442695
    %v1845 = vpow.pop %v1844
    %v1846 = vmul.f32 %v1843, 1.442695
    %v1847 = vpow.pop %v1846
    %v1848 = vadd.f32 %v1845, 1.0
    %v1849 = vadd.f32 %v1847, 1.0
    %v1850 = vrcp.pop %v1848
    %v1851 = vmul.f32 1.0, %v1850
    %v1852 = vrcp.pop %v1849
    %v1853 = vmul.f32 1.0, %v1852
    %v1854 = vmul.f32 %v1832, %v1851
    %v1855 = vmul.f32 %v1837, %v1853
    %s1856 = scalar_lea.vmem %s13, 64
    %v1857 = vld [vmem:[%s1856] sm:$0xff]
    %v1858 = vld [vmem:[%s1856 + $0x8] sm:$0xff]
    %v1859 = vld [vmem:[%s1856 + $0x10] sm:$0xff]
    %v1860 = vld [vmem:[%s1856 + $0x18] sm:$0xff]
    %v1861 = vld [vmem:[%s1856 + $0x20] sm:$0xff]
    %v1862 = vld [vmem:[%s1856 + $0x28] sm:$0xff]
    %v1863 = vld [vmem:[%s1856 + $0x30] sm:$0xff]
    %v1864 = vld [vmem:[%s1856 + $0x38] sm:$0xff]
    %v1866 = vsel %vm81, %v1854, 0
    %v1869 = vsel %vm81, %v1855, 0
    %1871 = vmatprep.subr.mxu0 0.0
    %1872 = vmatpush1.msra.mxu0 %v1857
    %1873 = vmatprep.subr.mxu0 0.0
    %1874 = vmatpush1.msra.mxu0 %v1858
    %1875 = vmatprep.subr.mxu0 0.0
    %1876 = vmatpush1.msra.mxu0 %v1859
    %1877 = vmatprep.subr.mxu0 0.0
    %1878 = vmatpush1.msra.mxu0 %v1860
    %1879 = vmatprep.subr.mxu0 0.0
    %1880 = vmatpush1.msra.mxu0 %v1861
    %1881 = vmatprep.subr.mxu0 0.0
    %1882 = vmatpush1.msra.mxu0 %v1862
    %1883 = vmatprep.subr.mxu0 0.0
    %1884 = vmatpush1.msra.mxu0 %v1863
    %1885 = vmatprep.subr.mxu0 0.0
    %1886 = vmatpush1.msra.mxu0 %v1864
    %1887 = vmatprep.subr.mxu0 0.0
    %1888 = vmatpush1.msra.mxu0 0.0
    %1889 = vmatprep.subr.mxu0 0.0
    %1890 = vmatpush1.msra.mxu0 0.0
    %1891 = vmatprep.subr.mxu0 0.0
    %1892 = vmatpush1.msra.mxu0 0.0
    %1893 = vmatprep.subr.mxu0 0.0
    %1894 = vmatpush1.msra.mxu0 0.0
    %1895 = vmatprep.subr.mxu0 0.0
    %1896 = vmatpush1.msra.mxu0 0.0
    %1897 = vmatprep.subr.mxu0 0.0
    %1898 = vmatpush1.msra.mxu0 0.0
    %1899 = vmatprep.subr.mxu0 0.0
    %1900 = vmatpush1.msra.mxu0 0.0
    %1901 = vmatprep.subr.mxu0 0.0
    %1902 = vmatpush1.msra.mxu0 0.0
    %1903 = vmatprep.subr.mxu0 0.0
    %1904 = vmatpush1.msra.mxu0 0.0
    %1905 = vmatprep.subr.mxu0 0.0
    %1906 = vmatpush1.msra.mxu0 0.0
    %1907 = vmatprep.subr.mxu0 0.0
    %1908 = vmatpush1.msra.mxu0 0.0
    %1909 = vmatprep.subr.mxu0 0.0
    %1910 = vmatpush1.msra.mxu0 0.0
    %1911 = vmatprep.subr.mxu0 0.0
    %1912 = vmatpush1.msra.mxu0 0.0
    %1913 = vmatprep.subr.mxu0 0.0
    %1914 = vmatpush1.msra.mxu0 0.0
    %1915 = vmatprep.subr.mxu0 0.0
    %1916 = vmatpush1.msra.mxu0 0.0
    %1917 = vmatprep.subr.mxu0 0.0
    %1918 = vmatpush1.msra.mxu0 0.0
    %1919 = vmatprep.subr.mxu0 0.0
    %1920 = vmatpush1.msra.mxu0 0.0
    %1921 = vmatprep.subr.mxu0 0.0
    %1922 = vmatpush1.msra.mxu0 0.0
    %1923 = vmatprep.subr.mxu0 0.0
    %1924 = vmatpush1.msra.mxu0 0.0
    %1925 = vmatprep.subr.mxu0 0.0
    %1926 = vmatpush1.msra.mxu0 0.0
    %1927 = vmatprep.subr.mxu0 0.0
    %1928 = vmatpush1.msra.mxu0 0.0
    %1929 = vmatprep.subr.mxu0 0.0
    %1930 = vmatpush1.msra.mxu0 0.0
    %1931 = vmatprep.subr.mxu0 0.0
    %1932 = vmatpush1.msra.mxu0 0.0
    %1933 = vmatprep.subr.mxu0 0.0
    %1934 = vmatpush1.msra.mxu0 0.0
    %1935 = vmatprep.mubr.f32.mxu0 0.0
    %1936 = vmatmul.mubr.f32.gmra.mrb[0].mxu0 %v1866
    %v1937 = vpop.f32.mrb[0].mxu0
    %v1938 = vadd.f32 0.0, %v1937
    %v1939 = vpop.f32.mrb[0].mxu0
    %1940 = vmatprep.mubr.f32.mxu0 0.0
    %1941 = vmatmul.mubr.f32.gmra.mrb[0].mxu0 %v1869
    %v1942 = vpop.f32.mrb[0].mxu0
    %v1943 = vadd.f32 0.0, %v1942
    %v1944 = vpop.f32.mrb[0].mxu0
    %1945 = vdwg.mxu0
    %v1946 = vadd.f32 %v1698, %v1938
    %v1947 = vadd.f32 %v1699, %v1943
    %s1948 = scalar_lea.vmem %s14, 1
    %v1949 = vld [vmem:[%s1948] sm:$0x1]
    %v1951 = vlaneseq
    %v1952 = vshrl.u32 %v1951, 7
    %v1953 = vsub.s32 0, %v1952
    %v1954 = vrot.slane %v1949, %v1953
    %v1956 = vadd.f32 %v1946, %v1954
    %v1957 = vadd.f32 %v1947, %v1954
    %v1958 = vld [vmem:[%s15] sm:$0x1]
    %v1959 = vld [vmem:[%s16] sm:$0x1]
    %v1960 = vsel %vm185, %v1956, 0.0
    %1961 = vadd.xlane.f32.xlu0 %v1960
    %v1962 = vpop.xlane.xlu0 %1961
    %v1963 = vsel %vm185, %v1957, 0.0
    %1964 = vadd.xlane.f32.xlu0 %v1963
    %v1965 = vpop.xlane.xlu0 %1964
    %v1966 = vmul.f32 %v1962, %v192
    %v1967 = vmul.f32 %v1965, %v192
    %v1968 = vsub.f32 %v1956, %v1966
    %v1969 = vsub.f32 %v1957, %v1967
    %v1970 = vmul.f32 %v1968, %v1968
    %v1971 = vmul.f32 %v1969, %v1969
    %v1972 = vsel %vm185, %v1970, 0.0
    %1973 = vadd.xlane.f32.xlu0 %v1972
    %v1974 = vpop.xlane.xlu0 %1973
    %v1975 = vsel %vm185, %v1971, 0.0
    %1976 = vadd.xlane.f32.xlu0 %v1975
    %v1977 = vpop.xlane.xlu0 %1976
    %v1978 = vmul.f32 %v1974, %v192
    %v1979 = vmul.f32 %v1977, %v192
    %v1980 = vadd.f32 %v1978, 1e-05
    %v1981 = vadd.f32 %v1979, 1e-05
    %v1982 = vrsqrt.pop %v1980
    %v1983 = vrsqrt.pop %v1981
    %v1984 = vmul.f32 %v1968, %v1982
    %v1985 = vmul.f32 %v1969, %v1983
    %v1987 = vlaneseq
    %v1988 = vshrl.u32 %v1987, 7
    %v1989 = vsub.s32 0, %v1988
    %v1990 = vrot.slane %v1958, %v1989
    %v1992 = vmul.f32 %v1984, %v1990
    %v1993 = vmul.f32 %v1985, %v1990
    %v1995 = vlaneseq
    %v1996 = vshrl.u32 %v1995, 7
    %v1997 = vsub.s32 0, %v1996
    %v1998 = vrot.slane %v1959, %v1997
    %v2000 = vadd.f32 %v1992, %v1998
    %v2001 = vadd.f32 %v1993, %v1998
    %v2002 = vsel %vm185, %v2000, 0.0
    %v2003 = vrot.slane %v2002, 4
    %v2004 = vadd.f32 %v2002, %v2003
    %v2005 = vrot.slane %v2004, 2
    %v2006 = vadd.f32 %v2004, %v2005
    %v2007 = vrot.slane %v2006, 1
    %v2008 = vadd.f32 %v2006, %v2007
    %v2009 = vsel %vm185, %v2001, 0.0
    %v2010 = vrot.slane %v2009, 4
    %v2011 = vadd.f32 %v2009, %v2010
    %v2012 = vrot.slane %v2011, 2
    %v2013 = vadd.f32 %v2011, %v2012
    %v2014 = vrot.slane %v2013, 1
    %v2015 = vadd.f32 %v2013, %v2014
    %v2016 = vrcp.pop 8.0
    %v2017 = vmul.f32 %v2008, %v2016
    %v2018 = vmul.f32 %v2015, %v2016
    %vm2021 = vcmask 1041409
    %v2022 = vsel %vm2021, %v2018, %v2017
    %vm2024 = vcmask 254976
    %2025 = vst.msk [vmem:[#allocation2] sm:$0x3] %vm2024, %v2022
    // Predicated region
    $region70: #{text_encoder_forward.1} parent=1 // pred_check
      _
    $region71: #{text_encoder_forward.1} parent=1 // pred_check_branch
      %2027 = sbr.rel (0) target = $region73
    $region72: #{text_encoder_forward.1} parent=1 // pred_region
      %s2029 = ssub.s32 32, 32
      %2030 = vsyncadd [#allocation3], %s2029
      %s2032 = sshll.u32 [#allocation2], 4
      %s2033 = int_to_ptr.vmem [resolvable:$true] %s2032
      %2035 = dma.vmem_to_hbm [thread:$0]  %s2033, 32, %s17, [#allocation3]
    $region73: #{text_encoder_forward.1} parent=1 // pred_fallthru
      _
    // Predicated region
    $region74: #{text_encoder_forward.1} parent=1 // pred_check
      _
    $region75: #{text_encoder_forward.1} parent=1 // pred_check_branch
      %2037 = sbr.rel (0) target = $region77
    $region76: #{text_encoder_forward.1} parent=1 // pred_region
      %2038 = dma.done [#allocation3], 32
    $region77: #{text_encoder_forward.1} parent=1 // pred_fallthru
      _
    %2039 = vsyncpa [#allocation3], 1

</llo_original>
